<compile_context>
chip_gen: v5e
topology: v5e:2x2
jax: 0.10.0
libtpu: 0.0.40
codegen_flags: <defaults>
</compile_context>

<pallas_src>
import functools

import jax
import jax.numpy as jnp
from jax import lax
from jax.experimental import pallas as pl
from jax.experimental.pallas import tpu as pltpu


def _erf(x):
    # Abramowitz & Stegun 7.1.26, |err| ~ 1.5e-7; reciprocal goes to the EUP.
    p = 0.3275911
    a1, a2, a3, a4, a5 = (0.254829592, -0.284496736, 1.421413741,
                          -1.453152027, 1.061405429)
    ax = jnp.abs(x)
    t = pl.reciprocal(1.0 + p * ax, approx=True)
    poly = ((((a5 * t + a4) * t + a3) * t + a2) * t + a1) * t
    y = 1.0 - poly * jnp.exp(-ax * ax)
    return jnp.where(x >= 0, y, -y)


def _gelu_exact(x):
    return 0.5 * x * (1.0 + _erf(x * 0.7071067811865476))


def _static_attention_kernel(q_ref, k_ref, v_ref,
                             wq_ref, bq_ref, wk_ref, bk_ref, wv_ref, bv_ref,
                             alpha_ref, wo_ref, bo_ref, g_ref, beta_ref,
                             wf_ref, bf_ref,
                             o_ref,
                             kp_sc, vp_sc,
                             *, head_num, head_dim, scale):
    bf16 = jnp.bfloat16
    qi = pl.program_id(1)

    # K / V projections are per-batch-element only; compute them once (first Sq
    # tile of each batch) and cache the bf16 results in VMEM scratch.
    @pl.when(qi == 0)
    def _():
        k = k_ref[0]          # (S, C) bf16
        v = v_ref[0]          # (S, C) bf16
        kp = jnp.dot(k, wk_ref[...], preferred_element_type=jnp.float32) + bk_ref[...]
        vp = jnp.dot(v, wv_ref[...], preferred_element_type=jnp.float32) + bv_ref[...]
        kp_sc[...] = kp.astype(bf16)
        vp_sc[...] = vp.astype(bf16)

    # Q projection for this (batch, Sq tile): bf16 MXU matmul, f32 accumulation.
    q = q_ref[0]              # (TQ, C) bf16
    qp = jnp.dot(q, wq_ref[...], preferred_element_type=jnp.float32) + bq_ref[...]

    # Fold the softmax scale into qp once (instead of per-head on (TQ, S) scores).
    qs_bf = (qp * scale).astype(bf16)
    kp_bf = kp_sc[...]        # (S, C) bf16
    vp_bf = vp_sc[...]        # (S, C) bf16

    # Per-head scaled-dot-product attention; results stay in vregs (no VMEM
    # scratch, no lane-masked partial stores).
    ctx_heads = []
    for h in range(head_num):
        lo = h * head_dim
        hi = lo + head_dim
        qh = qs_bf[:, lo:hi]                    # (TQ, D)
        kh = kp_bf[:, lo:hi]                    # (S,  D)
        vh = vp_bf[:, lo:hi]                    # (S,  D)
        # q @ k^T without an explicit transpose: contract the D axes.
        s = lax.dot_general(qh, kh, (((1,), (1,)), ((), ())),
                            preferred_element_type=jnp.float32)       # (TQ, S)
        s = s - jnp.max(s, axis=-1, keepdims=True)
        e = jnp.exp(s)
        attn = e * pl.reciprocal(jnp.sum(e, axis=-1, keepdims=True), approx=True)
        ctx_heads.append(jnp.dot(attn.astype(bf16), vh,
                                 preferred_element_type=jnp.float32))  # (TQ, D)

    # Merge heads (lane-dense) and add the relative_alpha residual on the
    # un-scaled f32 projection (alpha already broadcast per head into a (1, C) row).
    ctx = jnp.concatenate(ctx_heads, axis=-1)                          # (TQ, C)
    ctx = ctx + qp * alpha_ref[...]

    # multi_head_out: Linear -> Dropout(id) -> LayerNorm -> Linear -> GELU -> Dropout(id)
    h1 = jnp.dot(ctx.astype(bf16), wo_ref[...],
                 preferred_element_type=jnp.float32) + bo_ref[...]
    mu = jnp.mean(h1, axis=-1, keepdims=True)
    var = jnp.mean((h1 - mu) ** 2, axis=-1, keepdims=True)
    ln = (h1 - mu) * lax.rsqrt(var + 1e-5) * g_ref[...] + beta_ref[...]
    h2 = jnp.dot(ln.astype(bf16), wf_ref[...],
                 preferred_element_type=jnp.float32) + bf_ref[...]
    o_ref[0] = _gelu_exact(h2).astype(o_ref.dtype)


def _choose_q_tile(sq, cap=256):
    """Largest Sq tile <= cap that divides Sq and keeps the (8,128) sublane rule."""
    if sq <= cap:
        return sq
    for t in range(cap, 7, -1):
        if sq % t == 0 and t % 8 == 0:
            return t
    return sq   # fallback: no tiling


def static_attention_pallas(q, k, v, params, head_num):
    B, Sq, C = q.shape
    _, S, _ = k.shape
    assert C % head_num == 0
    head_dim = C // head_num
    scale = float(C) ** (-0.5)   # PyTorch scales by input_size**-0.5 (not head_dim)

    TQ = _choose_q_tile(Sq)
    nq = Sq // TQ

    bf16 = jnp.bfloat16
    row = lambda x: x.reshape(1, C).astype(jnp.float32)
    # relative_alpha (H,1,1) broadcast over head_dim -> (1, C) row (head-contiguous).
    alpha_full = jnp.repeat(params["alpha"].astype(jnp.float32), head_dim).reshape(1, C)

    args = (
        q.astype(bf16), k.astype(bf16), v.astype(bf16),
        params["wq"].T.astype(bf16), row(params["bq"]),
        params["wk"].T.astype(bf16), row(params["bk"]),
        params["wv"].T.astype(bf16), row(params["bv"]),
        alpha_full,
        params["wo"].T.astype(bf16), row(params["bo"]),
        row(params["ln_g"]), row(params["ln_b"]),
        params["wf"].T.astype(bf16), row(params["bf"]),
    )

    w_spec = pl.BlockSpec((C, C), lambda b, qi: (0, 0))
    r_spec = pl.BlockSpec((1, C), lambda b, qi: (0, 0))
    in_specs = [
        pl.BlockSpec((1, TQ, C), lambda b, qi: (b, qi, 0)),   # q (Sq-tiled)
        pl.BlockSpec((1, S, C), lambda b, qi: (b, 0, 0)),     # k (full S per batch)
        pl.BlockSpec((1, S, C), lambda b, qi: (b, 0, 0)),     # v
        w_spec, r_spec, w_spec, r_spec, w_spec, r_spec,
        r_spec,                                               # alpha row
        w_spec, r_spec, r_spec, r_spec, w_spec, r_spec,
    ]

    # Explicit VMEM budget (v5e scoped default is only 16 MiB; cap below v7x's
    # 64 MiB physical).  Rough estimate: double-buffered activation/weight blocks
    # plus live intermediates and the projected-K/V scratch.
    est = (2 * TQ * C * 2                 # q tile (bf16, 2 buffers)
           + 2 * 2 * S * C * 2            # k, v input blocks
           + 2 * S * C * 2                # projected K/V scratch (bf16)
           + 2 * TQ * C * 4               # output tile (f32)
           + 2 * (5 * C * C + 8 * C) * 2  # weights + rows
           + head_num * TQ * S * 4        # per-head score matrices
           + 8 * TQ * C * 4)              # misc f32 intermediates
    vmem_limit = int(min(60 * 1024 * 1024, max(32 * 1024 * 1024, 2 * est)))

    kernel = functools.partial(_static_attention_kernel,
                               head_num=head_num, head_dim=head_dim, scale=scale)

    grid_spec = pltpu.PrefetchScalarGridSpec(
        num_scalar_prefetch=0,
        grid=(B, nq),
        in_specs=in_specs,
        out_specs=pl.BlockSpec((1, TQ, C), lambda b, qi: (b, qi, 0)),
        scratch_shapes=[pltpu.VMEM((S, C), bf16),   # projected K (bf16)
                        pltpu.VMEM((S, C), bf16)],  # projected V (bf16)
    )

    return pl.pallas_call(
        kernel,
        out_shape=jax.ShapeDtypeStruct((B, Sq, C), jnp.float32),
        grid_spec=grid_spec,
        compiler_params=pltpu.CompilerParams(
            # batch axis parallel (megacore); Sq-tile axis serial so the cached
            # K/V projections in scratch stay valid across tiles of one batch.
            dimension_semantics=("parallel", "arbitrary"),
            vmem_limit_bytes=vmem_limit),
    )(*args)


def static_attention_reference(q, k, v, params, head_num):
    """Pure-JAX f32 reference mirroring the PyTorch forward (eval mode)."""
    B, Sq, C = q.shape
    _, S, _ = k.shape
    D = C // head_num
    scale = float(C) ** (-0.5)
    lin = lambda x, w, b: x @ w.T + b
    qp = lin(q, params["wq"], params["bq"]).reshape(B, Sq, head_num, D).transpose(0, 2, 1, 3)
    kp = lin(k, params["wk"], params["bk"]).reshape(B, S, head_num, D).transpose(0, 2, 1, 3)
    vp = lin(v, params["wv"], params["bv"]).reshape(B, S, head_num, D).transpose(0, 2, 1, 3)
    attn = jnp.einsum("bhqd,bhkd->bhqk", qp, kp) * scale
    attn = jax.nn.softmax(attn, axis=-1)
    out = jnp.einsum("bhqk,bhkd->bhqd", attn, vp)
    out = out + qp * params["alpha"].reshape(1, head_num, 1, 1)
    out = out.transpose(0, 2, 1, 3).reshape(B, Sq, C)
    h1 = lin(out, params["wo"], params["bo"])
    mu = h1.mean(-1, keepdims=True)
    var = ((h1 - mu) ** 2).mean(-1, keepdims=True)
    ln = (h1 - mu) / jnp.sqrt(var + 1e-5) * params["ln_g"] + params["ln_b"]
    h2 = lin(ln, params["wf"], params["bf"])
    return jax.nn.gelu(h2, approximate=False)


if __name__ == "__main__":
    B, S, C, H = 2, 8, 32, 4     # batch, seq, input_size, head_num

    key = jax.random.PRNGKey(0)
    ks = jax.random.split(key, 16)
    wmat = lambda kk: jax.random.normal(kk, (C, C), jnp.float32) * 0.1
    bvec = lambda kk: jax.random.normal(kk, (C,), jnp.float32) * 0.1

    params = {
        "wq": wmat(ks[0]), "bq": bvec(ks[1]),
        "wk": wmat(ks[2]), "bk": bvec(ks[3]),
        "wv": wmat(ks[4]), "bv": bvec(ks[5]),
        "alpha": jax.random.normal(ks[6], (H,), jnp.float32),   # relative_alpha (H,1,1)
        "wo": wmat(ks[7]), "bo": bvec(ks[8]),                   # multi_head_out Linear1
        "ln_g": jnp.ones((C,), jnp.float32),                    # PreNorm LayerNorm
        "ln_b": jnp.zeros((C,), jnp.float32),
        "wf": wmat(ks[9]), "bf": bvec(ks[10]),                  # FeedForward Linear
    }

    q = jax.random.normal(ks[11], (B, S, C), jnp.float32)
    k = jax.random.normal(ks[12], (B, S, C), jnp.float32)
    v = jax.random.normal(ks[13], (B, S, C), jnp.float32)

    out = static_attention_pallas(q, k, v, params, H)
    out = jax.block_until_ready(out)

    ref = static_attention_reference(q, k, v, params, H)
    assert out.shape == (B, S, C)
    # bf16 MXU inputs with f32 accumulation -> slightly looser tolerance than the
    # pure-f32 kernel (reference stays f32).
    assert jnp.allclose(out, ref, atol=5e-2, rtol=5e-2), \
        f"max abs diff = {jnp.max(jnp.abs(out - ref))}"

    print("KERNEL_OK")
</pallas_src>

<mosaic_0001>
module attributes {stable_mosaic.version = 11 : i64} {
  func.func @_static_attention_kernel(%arg0: i32, %arg1: i32, %arg2: memref<1x8x32xbf16, #tpu.memory_space<vmem>>, %arg3: memref<1x8x32xbf16, #tpu.memory_space<vmem>>, %arg4: memref<1x8x32xbf16, #tpu.memory_space<vmem>>, %arg5: memref<32x32xbf16, #tpu.memory_space<vmem>>, %arg6: memref<1x32xf32, #tpu.memory_space<vmem>>, %arg7: memref<32x32xbf16, #tpu.memory_space<vmem>>, %arg8: memref<1x32xf32, #tpu.memory_space<vmem>>, %arg9: memref<32x32xbf16, #tpu.memory_space<vmem>>, %arg10: memref<1x32xf32, #tpu.memory_space<vmem>>, %arg11: memref<1x32xf32, #tpu.memory_space<vmem>>, %arg12: memref<32x32xbf16, #tpu.memory_space<vmem>>, %arg13: memref<1x32xf32, #tpu.memory_space<vmem>>, %arg14: memref<1x32xf32, #tpu.memory_space<vmem>>, %arg15: memref<1x32xf32, #tpu.memory_space<vmem>>, %arg16: memref<32x32xbf16, #tpu.memory_space<vmem>>, %arg17: memref<1x32xf32, #tpu.memory_space<vmem>>, %arg18: memref<1x8x32xf32, #tpu.memory_space<vmem>>, %arg19: memref<8x32xbf16, #tpu.memory_space<vmem>>, %arg20: memref<8x32xbf16, #tpu.memory_space<vmem>>) attributes {dimension_semantics = [#tpu.dimension_semantics<parallel>, #tpu.dimension_semantics<arbitrary>], iteration_bounds = array<i64: 2, 1>, scalar_prefetch = 0 : i64, scratch_operands = 2 : i64, tpu.core_type = #tpu.core_type<tc>, window_params = [{transform_indices = @transform_0, window_bounds = array<i64: 1, 8, 32>}, {transform_indices = @transform_1, window_bounds = array<i64: 1, 8, 32>}, {transform_indices = @transform_2, window_bounds = array<i64: 1, 8, 32>}, {pipeline_mode = #tpu.pipeline_mode<synchronous>, transform_indices = @transform_3, window_bounds = array<i64: 32, 32>}, {pipeline_mode = #tpu.pipeline_mode<synchronous>, transform_indices = @transform_4, window_bounds = array<i64: 1, 32>}, {pipeline_mode = #tpu.pipeline_mode<synchronous>, transform_indices = @transform_5, window_bounds = array<i64: 32, 32>}, {pipeline_mode = #tpu.pipeline_mode<synchronous>, transform_indices = @transform_6, window_bounds = array<i64: 1, 32>}, {pipeline_mode = #tpu.pipeline_mode<synchronous>, transform_indices = @transform_7, window_bounds = array<i64: 32, 32>}, {pipeline_mode = #tpu.pipeline_mode<synchronous>, transform_indices = @transform_8, window_bounds = array<i64: 1, 32>}, {pipeline_mode = #tpu.pipeline_mode<synchronous>, transform_indices = @transform_9, window_bounds = array<i64: 1, 32>}, {pipeline_mode = #tpu.pipeline_mode<synchronous>, transform_indices = @transform_10, window_bounds = array<i64: 32, 32>}, {pipeline_mode = #tpu.pipeline_mode<synchronous>, transform_indices = @transform_11, window_bounds = array<i64: 1, 32>}, {pipeline_mode = #tpu.pipeline_mode<synchronous>, transform_indices = @transform_12, window_bounds = array<i64: 1, 32>}, {pipeline_mode = #tpu.pipeline_mode<synchronous>, transform_indices = @transform_13, window_bounds = array<i64: 1, 32>}, {pipeline_mode = #tpu.pipeline_mode<synchronous>, transform_indices = @transform_14, window_bounds = array<i64: 32, 32>}, {pipeline_mode = #tpu.pipeline_mode<synchronous>, transform_indices = @transform_15, window_bounds = array<i64: 1, 32>}, {transform_indices = @transform_16, window_bounds = array<i64: 1, 8, 32>}]} {
    %c0_i32 = arith.constant 0 : i32
    %0 = arith.cmpi eq, %arg1, %c0_i32 : i32
    %1 = arith.extui %0 : i1 to i32
    %c0_i32_0 = arith.constant 0 : i32
    %2 = arith.cmpi ne, %1, %c0_i32_0 : i32
    scf.if %2 {
      %c0_66 = arith.constant 0 : index
      %c0_67 = arith.constant 0 : index
      %c0_68 = arith.constant 0 : index
      %162 = vector.load %arg3[%c0_66, %c0_67, %c0_68] : memref<1x8x32xbf16, #tpu.memory_space<vmem>>, vector<1x8x32xbf16>
      %163 = vector.shape_cast %162 : vector<1x8x32xbf16> to vector<8x32xbf16>
      %c0_69 = arith.constant 0 : index
      %c0_70 = arith.constant 0 : index
      %c0_71 = arith.constant 0 : index
      %164 = vector.load %arg4[%c0_69, %c0_70, %c0_71] : memref<1x8x32xbf16, #tpu.memory_space<vmem>>, vector<1x8x32xbf16>
      %165 = vector.shape_cast %164 : vector<1x8x32xbf16> to vector<8x32xbf16>
      %c0_72 = arith.constant 0 : index
      %c0_73 = arith.constant 0 : index
      %166 = vector.load %arg7[%c0_72, %c0_73] : memref<32x32xbf16, #tpu.memory_space<vmem>>, vector<32x32xbf16>
      %cst_74 = arith.constant dense<0.000000e+00> : vector<8x32xf32>
      %167 = tpu.matmul %163, %166, %cst_74 {dimension_numbers = #tpu.dot_dimension_numbers<[1], [0], [0], [1], [0, 0, 1, 1], [], []>} : vector<8x32xbf16>, vector<32x32xbf16>, vector<8x32xf32> -> vector<8x32xf32>
      %c0_75 = arith.constant 0 : index
      %c0_76 = arith.constant 0 : index
      %168 = vector.load %arg8[%c0_75, %c0_76] : memref<1x32xf32, #tpu.memory_space<vmem>>, vector<1x32xf32>
      %169 = vector.broadcast %168 : vector<1x32xf32> to vector<8x32xf32>
      %170 = arith.addf %167, %169 : vector<8x32xf32>
      %c0_77 = arith.constant 0 : index
      %c0_78 = arith.constant 0 : index
      %171 = vector.load %arg9[%c0_77, %c0_78] : memref<32x32xbf16, #tpu.memory_space<vmem>>, vector<32x32xbf16>
      %cst_79 = arith.constant dense<0.000000e+00> : vector<8x32xf32>
      %172 = tpu.matmul %165, %171, %cst_79 {dimension_numbers = #tpu.dot_dimension_numbers<[1], [0], [0], [1], [0, 0, 1, 1], [], []>} : vector<8x32xbf16>, vector<32x32xbf16>, vector<8x32xf32> -> vector<8x32xf32>
      %c0_80 = arith.constant 0 : index
      %c0_81 = arith.constant 0 : index
      %173 = vector.load %arg10[%c0_80, %c0_81] : memref<1x32xf32, #tpu.memory_space<vmem>>, vector<1x32xf32>
      %174 = vector.broadcast %173 : vector<1x32xf32> to vector<8x32xf32>
      %175 = arith.addf %172, %174 : vector<8x32xf32>
      %176 = arith.truncf %170 : vector<8x32xf32> to vector<8x32xbf16>
      %c0_82 = arith.constant 0 : index
      %c0_83 = arith.constant 0 : index
      %177 = vector.load %arg19[%c0_82, %c0_83] : memref<8x32xbf16, #tpu.memory_space<vmem>>, vector<8x32xbf16>
      tpu.vector_store %arg19[%c0_82, %c0_83], %176 {strides = array<i32>} : memref<8x32xbf16, #tpu.memory_space<vmem>>, vector<8x32xbf16>,
      %178 = arith.truncf %175 : vector<8x32xf32> to vector<8x32xbf16>
      %c0_84 = arith.constant 0 : index
      %c0_85 = arith.constant 0 : index
      %179 = vector.load %arg20[%c0_84, %c0_85] : memref<8x32xbf16, #tpu.memory_space<vmem>>, vector<8x32xbf16>
      tpu.vector_store %arg20[%c0_84, %c0_85], %178 {strides = array<i32>} : memref<8x32xbf16, #tpu.memory_space<vmem>>, vector<8x32xbf16>,
    } else {
    }
    %c0 = arith.constant 0 : index
    %c0_1 = arith.constant 0 : index
    %c0_2 = arith.constant 0 : index
    %3 = vector.load %arg2[%c0, %c0_1, %c0_2] : memref<1x8x32xbf16, #tpu.memory_space<vmem>>, vector<1x8x32xbf16>
    %4 = vector.shape_cast %3 : vector<1x8x32xbf16> to vector<8x32xbf16>
    %c0_3 = arith.constant 0 : index
    %c0_4 = arith.constant 0 : index
    %5 = vector.load %arg5[%c0_3, %c0_4] : memref<32x32xbf16, #tpu.memory_space<vmem>>, vector<32x32xbf16>
    %cst = arith.constant dense<0.000000e+00> : vector<8x32xf32>
    %6 = tpu.matmul %4, %5, %cst {dimension_numbers = #tpu.dot_dimension_numbers<[1], [0], [0], [1], [0, 0, 1, 1], [], []>} : vector<8x32xbf16>, vector<32x32xbf16>, vector<8x32xf32> -> vector<8x32xf32>
    %c0_5 = arith.constant 0 : index
    %c0_6 = arith.constant 0 : index
    %7 = vector.load %arg6[%c0_5, %c0_6] : memref<1x32xf32, #tpu.memory_space<vmem>>, vector<1x32xf32>
    %8 = vector.broadcast %7 : vector<1x32xf32> to vector<8x32xf32>
    %9 = arith.addf %6, %8 : vector<8x32xf32>
    %cst_7 = arith.constant 0.176776692 : f32
    %10 = vector.broadcast %cst_7 : f32 to vector<8x32xf32>
    %11 = arith.mulf %9, %10 : vector<8x32xf32>
    %12 = arith.truncf %11 : vector<8x32xf32> to vector<8x32xbf16>
    %c0_8 = arith.constant 0 : index
    %c0_9 = arith.constant 0 : index
    %13 = vector.load %arg19[%c0_8, %c0_9] : memref<8x32xbf16, #tpu.memory_space<vmem>>, vector<8x32xbf16>
    %c0_10 = arith.constant 0 : index
    %c0_11 = arith.constant 0 : index
    %14 = vector.load %arg20[%c0_10, %c0_11] : memref<8x32xbf16, #tpu.memory_space<vmem>>, vector<8x32xbf16>
    %15 = vector.extract_strided_slice %12 {offsets = [0, 0], sizes = [8, 8], strides = [1, 1]} : vector<8x32xbf16> to vector<8x8xbf16>
    %16 = vector.extract_strided_slice %13 {offsets = [0, 0], sizes = [8, 8], strides = [1, 1]} : vector<8x32xbf16> to vector<8x8xbf16>
    %17 = vector.extract_strided_slice %14 {offsets = [0, 0], sizes = [8, 8], strides = [1, 1]} : vector<8x32xbf16> to vector<8x8xbf16>
    %cst_12 = arith.constant dense<0.000000e+00> : vector<8x8xf32>
    %18 = tpu.matmul %15, %16, %cst_12 {dimension_numbers = #tpu.dot_dimension_numbers<[1], [1], [0], [0], [0, 0, 1, 0], [], []>} : vector<8x8xbf16>, vector<8x8xbf16>, vector<8x8xf32> -> vector<8x8xf32>
    %cst_13 = arith.constant dense<0xFF800000> : vector<8xf32>
    %19 = vector.multi_reduction <maximumf>, %18, %cst_13 [1] : vector<8x8xf32> to vector<8xf32>
    %20 = vector.shape_cast %19 : vector<8xf32> to vector<8x1xf32>
    %21 = vector.broadcast %20 : vector<8x1xf32> to vector<8x8xf32>
    %22 = arith.subf %18, %21 : vector<8x8xf32>
    %23 = math.exp %22 : vector<8x8xf32>
    %cst_14 = arith.constant dense<0.000000e+00> : vector<8xf32>
    %24 = vector.multi_reduction <add>, %23, %cst_14 [1] : vector<8x8xf32> to vector<8xf32>
    %25 = vector.shape_cast %24 : vector<8xf32> to vector<8x1xf32>
    %26 = tpu.reciprocal %25 {approx = true} : vector<8x1xf32> -> vector<8x1xf32>
    %27 = vector.broadcast %26 : vector<8x1xf32> to vector<8x8xf32>
    %28 = arith.mulf %23, %27 : vector<8x8xf32>
    %29 = arith.truncf %28 : vector<8x8xf32> to vector<8x8xbf16>
    %cst_15 = arith.constant dense<0.000000e+00> : vector<8x8xf32>
    %30 = tpu.matmul %29, %17, %cst_15 {dimension_numbers = #tpu.dot_dimension_numbers<[1], [0], [0], [1], [0, 0, 1, 1], [], []>} : vector<8x8xbf16>, vector<8x8xbf16>, vector<8x8xf32> -> vector<8x8xf32>
    %31 = vector.extract_strided_slice %12 {offsets = [0, 8], sizes = [8, 8], strides = [1, 1]} : vector<8x32xbf16> to vector<8x8xbf16>
    %32 = vector.extract_strided_slice %13 {offsets = [0, 8], sizes = [8, 8], strides = [1, 1]} : vector<8x32xbf16> to vector<8x8xbf16>
    %33 = vector.extract_strided_slice %14 {offsets = [0, 8], sizes = [8, 8], strides = [1, 1]} : vector<8x32xbf16> to vector<8x8xbf16>
    %cst_16 = arith.constant dense<0.000000e+00> : vector<8x8xf32>
    %34 = tpu.matmul %31, %32, %cst_16 {dimension_numbers = #tpu.dot_dimension_numbers<[1], [1], [0], [0], [0, 0, 1, 0], [], []>} : vector<8x8xbf16>, vector<8x8xbf16>, vector<8x8xf32> -> vector<8x8xf32>
    %cst_17 = arith.constant dense<0xFF800000> : vector<8xf32>
    %35 = vector.multi_reduction <maximumf>, %34, %cst_17 [1] : vector<8x8xf32> to vector<8xf32>
    %36 = vector.shape_cast %35 : vector<8xf32> to vector<8x1xf32>
    %37 = vector.broadcast %36 : vector<8x1xf32> to vector<8x8xf32>
    %38 = arith.subf %34, %37 : vector<8x8xf32>
    %39 = math.exp %38 : vector<8x8xf32>
    %cst_18 = arith.constant dense<0.000000e+00> : vector<8xf32>
    %40 = vector.multi_reduction <add>, %39, %cst_18 [1] : vector<8x8xf32> to vector<8xf32>
    %41 = vector.shape_cast %40 : vector<8xf32> to vector<8x1xf32>
    %42 = tpu.reciprocal %41 {approx = true} : vector<8x1xf32> -> vector<8x1xf32>
    %43 = vector.broadcast %42 : vector<8x1xf32> to vector<8x8xf32>
    %44 = arith.mulf %39, %43 : vector<8x8xf32>
    %45 = arith.truncf %44 : vector<8x8xf32> to vector<8x8xbf16>
    %cst_19 = arith.constant dense<0.000000e+00> : vector<8x8xf32>
    %46 = tpu.matmul %45, %33, %cst_19 {dimension_numbers = #tpu.dot_dimension_numbers<[1], [0], [0], [1], [0, 0, 1, 1], [], []>} : vector<8x8xbf16>, vector<8x8xbf16>, vector<8x8xf32> -> vector<8x8xf32>
    %47 = vector.extract_strided_slice %12 {offsets = [0, 16], sizes = [8, 8], strides = [1, 1]} : vector<8x32xbf16> to vector<8x8xbf16>
    %48 = vector.extract_strided_slice %13 {offsets = [0, 16], sizes = [8, 8], strides = [1, 1]} : vector<8x32xbf16> to vector<8x8xbf16>
    %49 = vector.extract_strided_slice %14 {offsets = [0, 16], sizes = [8, 8], strides = [1, 1]} : vector<8x32xbf16> to vector<8x8xbf16>
    %cst_20 = arith.constant dense<0.000000e+00> : vector<8x8xf32>
    %50 = tpu.matmul %47, %48, %cst_20 {dimension_numbers = #tpu.dot_dimension_numbers<[1], [1], [0], [0], [0, 0, 1, 0], [], []>} : vector<8x8xbf16>, vector<8x8xbf16>, vector<8x8xf32> -> vector<8x8xf32>
    %cst_21 = arith.constant dense<0xFF800000> : vector<8xf32>
    %51 = vector.multi_reduction <maximumf>, %50, %cst_21 [1] : vector<8x8xf32> to vector<8xf32>
    %52 = vector.shape_cast %51 : vector<8xf32> to vector<8x1xf32>
    %53 = vector.broadcast %52 : vector<8x1xf32> to vector<8x8xf32>
    %54 = arith.subf %50, %53 : vector<8x8xf32>
    %55 = math.exp %54 : vector<8x8xf32>
    %cst_22 = arith.constant dense<0.000000e+00> : vector<8xf32>
    %56 = vector.multi_reduction <add>, %55, %cst_22 [1] : vector<8x8xf32> to vector<8xf32>
    %57 = vector.shape_cast %56 : vector<8xf32> to vector<8x1xf32>
    %58 = tpu.reciprocal %57 {approx = true} : vector<8x1xf32> -> vector<8x1xf32>
    %59 = vector.broadcast %58 : vector<8x1xf32> to vector<8x8xf32>
    %60 = arith.mulf %55, %59 : vector<8x8xf32>
    %61 = arith.truncf %60 : vector<8x8xf32> to vector<8x8xbf16>
    %cst_23 = arith.constant dense<0.000000e+00> : vector<8x8xf32>
    %62 = tpu.matmul %61, %49, %cst_23 {dimension_numbers = #tpu.dot_dimension_numbers<[1], [0], [0], [1], [0, 0, 1, 1], [], []>} : vector<8x8xbf16>, vector<8x8xbf16>, vector<8x8xf32> -> vector<8x8xf32>
    %63 = vector.extract_strided_slice %12 {offsets = [0, 24], sizes = [8, 8], strides = [1, 1]} : vector<8x32xbf16> to vector<8x8xbf16>
    %64 = vector.extract_strided_slice %13 {offsets = [0, 24], sizes = [8, 8], strides = [1, 1]} : vector<8x32xbf16> to vector<8x8xbf16>
    %65 = vector.extract_strided_slice %14 {offsets = [0, 24], sizes = [8, 8], strides = [1, 1]} : vector<8x32xbf16> to vector<8x8xbf16>
    %cst_24 = arith.constant dense<0.000000e+00> : vector<8x8xf32>
    %66 = tpu.matmul %63, %64, %cst_24 {dimension_numbers = #tpu.dot_dimension_numbers<[1], [1], [0], [0], [0, 0, 1, 0], [], []>} : vector<8x8xbf16>, vector<8x8xbf16>, vector<8x8xf32> -> vector<8x8xf32>
    %cst_25 = arith.constant dense<0xFF800000> : vector<8xf32>
    %67 = vector.multi_reduction <maximumf>, %66, %cst_25 [1] : vector<8x8xf32> to vector<8xf32>
    %68 = vector.shape_cast %67 : vector<8xf32> to vector<8x1xf32>
    %69 = vector.broadcast %68 : vector<8x1xf32> to vector<8x8xf32>
    %70 = arith.subf %66, %69 : vector<8x8xf32>
    %71 = math.exp %70 : vector<8x8xf32>
    %cst_26 = arith.constant dense<0.000000e+00> : vector<8xf32>
    %72 = vector.multi_reduction <add>, %71, %cst_26 [1] : vector<8x8xf32> to vector<8xf32>
    %73 = vector.shape_cast %72 : vector<8xf32> to vector<8x1xf32>
    %74 = tpu.reciprocal %73 {approx = true} : vector<8x1xf32> -> vector<8x1xf32>
    %75 = vector.broadcast %74 : vector<8x1xf32> to vector<8x8xf32>
    %76 = arith.mulf %71, %75 : vector<8x8xf32>
    %77 = arith.truncf %76 : vector<8x8xf32> to vector<8x8xbf16>
    %cst_27 = arith.constant dense<0.000000e+00> : vector<8x8xf32>
    %78 = tpu.matmul %77, %65, %cst_27 {dimension_numbers = #tpu.dot_dimension_numbers<[1], [0], [0], [1], [0, 0, 1, 1], [], []>} : vector<8x8xbf16>, vector<8x8xbf16>, vector<8x8xf32> -> vector<8x8xf32>
    %79 = tpu.concatenate %30, %46, %62, %78 in 1 : vector<8x8xf32>, vector<8x8xf32>, vector<8x8xf32>, vector<8x8xf32> -> vector<8x32xf32>
    %c0_28 = arith.constant 0 : index
    %c0_29 = arith.constant 0 : index
    %80 = vector.load %arg11[%c0_28, %c0_29] : memref<1x32xf32, #tpu.memory_space<vmem>>, vector<1x32xf32>
    %81 = vector.broadcast %80 : vector<1x32xf32> to vector<8x32xf32>
    %82 = arith.mulf %9, %81 : vector<8x32xf32>
    %83 = arith.addf %79, %82 : vector<8x32xf32>
    %84 = arith.truncf %83 : vector<8x32xf32> to vector<8x32xbf16>
    %c0_30 = arith.constant 0 : index
    %c0_31 = arith.constant 0 : index
    %85 = vector.load %arg12[%c0_30, %c0_31] : memref<32x32xbf16, #tpu.memory_space<vmem>>, vector<32x32xbf16>
    %cst_32 = arith.constant dense<0.000000e+00> : vector<8x32xf32>
    %86 = tpu.matmul %84, %85, %cst_32 {dimension_numbers = #tpu.dot_dimension_numbers<[1], [0], [0], [1], [0, 0, 1, 1], [], []>} : vector<8x32xbf16>, vector<32x32xbf16>, vector<8x32xf32> -> vector<8x32xf32>
    %c0_33 = arith.constant 0 : index
    %c0_34 = arith.constant 0 : index
    %87 = vector.load %arg13[%c0_33, %c0_34] : memref<1x32xf32, #tpu.memory_space<vmem>>, vector<1x32xf32>
    %88 = vector.broadcast %87 : vector<1x32xf32> to vector<8x32xf32>
    %89 = arith.addf %86, %88 : vector<8x32xf32>
    %cst_35 = arith.constant dense<0.000000e+00> : vector<8xf32>
    %90 = vector.multi_reduction <add>, %89, %cst_35 [1] : vector<8x32xf32> to vector<8xf32>
    %91 = vector.shape_cast %90 : vector<8xf32> to vector<8x1xf32>
    %cst_36 = arith.constant 3.200000e+01 : f32
    %92 = vector.broadcast %cst_36 : f32 to vector<8x1xf32>
    %93 = arith.divf %91, %92 : vector<8x1xf32>
    %94 = vector.broadcast %93 : vector<8x1xf32> to vector<8x32xf32>
    %95 = arith.subf %89, %94 : vector<8x32xf32>
    %96 = arith.mulf %95, %95 : vector<8x32xf32>
    %cst_37 = arith.constant dense<0.000000e+00> : vector<8xf32>
    %97 = vector.multi_reduction <add>, %96, %cst_37 [1] : vector<8x32xf32> to vector<8xf32>
    %98 = vector.shape_cast %97 : vector<8xf32> to vector<8x1xf32>
    %cst_38 = arith.constant 3.200000e+01 : f32
    %99 = vector.broadcast %cst_38 : f32 to vector<8x1xf32>
    %100 = arith.divf %98, %99 : vector<8x1xf32>
    %101 = vector.broadcast %93 : vector<8x1xf32> to vector<8x32xf32>
    %102 = arith.subf %89, %101 : vector<8x32xf32>
    %cst_39 = arith.constant 9.99999974E-6 : f32
    %103 = vector.broadcast %cst_39 : f32 to vector<8x1xf32>
    %104 = arith.addf %100, %103 : vector<8x1xf32>
    %105 = math.rsqrt %104 : vector<8x1xf32>
    %106 = vector.broadcast %105 : vector<8x1xf32> to vector<8x32xf32>
    %107 = arith.mulf %102, %106 : vector<8x32xf32>
    %c0_40 = arith.constant 0 : index
    %c0_41 = arith.constant 0 : index
    %108 = vector.load %arg14[%c0_40, %c0_41] : memref<1x32xf32, #tpu.memory_space<vmem>>, vector<1x32xf32>
    %109 = vector.broadcast %108 : vector<1x32xf32> to vector<8x32xf32>
    %110 = arith.mulf %107, %109 : vector<8x32xf32>
    %c0_42 = arith.constant 0 : index
    %c0_43 = arith.constant 0 : index
    %111 = vector.load %arg15[%c0_42, %c0_43] : memref<1x32xf32, #tpu.memory_space<vmem>>, vector<1x32xf32>
    %112 = vector.broadcast %111 : vector<1x32xf32> to vector<8x32xf32>
    %113 = arith.addf %110, %112 : vector<8x32xf32>
    %114 = arith.truncf %113 : vector<8x32xf32> to vector<8x32xbf16>
    %c0_44 = arith.constant 0 : index
    %c0_45 = arith.constant 0 : index
    %115 = vector.load %arg16[%c0_44, %c0_45] : memref<32x32xbf16, #tpu.memory_space<vmem>>, vector<32x32xbf16>
    %cst_46 = arith.constant dense<0.000000e+00> : vector<8x32xf32>
    %116 = tpu.matmul %114, %115, %cst_46 {dimension_numbers = #tpu.dot_dimension_numbers<[1], [0], [0], [1], [0, 0, 1, 1], [], []>} : vector<8x32xbf16>, vector<32x32xbf16>, vector<8x32xf32> -> vector<8x32xf32>
    %c0_47 = arith.constant 0 : index
    %c0_48 = arith.constant 0 : index
    %117 = vector.load %arg17[%c0_47, %c0_48] : memref<1x32xf32, #tpu.memory_space<vmem>>, vector<1x32xf32>
    %118 = vector.broadcast %117 : vector<1x32xf32> to vector<8x32xf32>
    %119 = arith.addf %116, %118 : vector<8x32xf32>
    %cst_49 = arith.constant 5.000000e-01 : f32
    %120 = vector.broadcast %cst_49 : f32 to vector<8x32xf32>
    %121 = arith.mulf %120, %119 : vector<8x32xf32>
    %cst_50 = arith.constant 0.707106769 : f32
    %122 = vector.broadcast %cst_50 : f32 to vector<8x32xf32>
    %123 = arith.mulf %119, %122 : vector<8x32xf32>
    %124 = math.absf %123 : vector<8x32xf32>
    %cst_51 = arith.constant 0.327591091 : f32
    %125 = vector.broadcast %cst_51 : f32 to vector<8x32xf32>
    %126 = arith.mulf %125, %124 : vector<8x32xf32>
    %cst_52 = arith.constant 1.000000e+00 : f32
    %127 = vector.broadcast %cst_52 : f32 to vector<8x32xf32>
    %128 = arith.addf %127, %126 : vector<8x32xf32>
    %129 = tpu.reciprocal %128 {approx = true} : vector<8x32xf32> -> vector<8x32xf32>
    %cst_53 = arith.constant 1.06140542 : f32
    %130 = vector.broadcast %cst_53 : f32 to vector<8x32xf32>
    %131 = arith.mulf %130, %129 : vector<8x32xf32>
    %cst_54 = arith.constant -1.45315206 : f32
    %132 = vector.broadcast %cst_54 : f32 to vector<8x32xf32>
    %133 = arith.addf %131, %132 : vector<8x32xf32>
    %134 = arith.mulf %133, %129 : vector<8x32xf32>
    %cst_55 = arith.constant 1.42141378 : f32
    %135 = vector.broadcast %cst_55 : f32 to vector<8x32xf32>
    %136 = arith.addf %134, %135 : vector<8x32xf32>
    %137 = arith.mulf %136, %129 : vector<8x32xf32>
    %cst_56 = arith.constant -0.284496725 : f32
    %138 = vector.broadcast %cst_56 : f32 to vector<8x32xf32>
    %139 = arith.addf %137, %138 : vector<8x32xf32>
    %140 = arith.mulf %139, %129 : vector<8x32xf32>
    %cst_57 = arith.constant 0.254829586 : f32
    %141 = vector.broadcast %cst_57 : f32 to vector<8x32xf32>
    %142 = arith.addf %140, %141 : vector<8x32xf32>
    %143 = arith.mulf %142, %129 : vector<8x32xf32>
    %cst_58 = arith.constant 0.000000e+00 : f32
    %144 = vector.broadcast %cst_58 : f32 to vector<8x32xf32>
    %145 = arith.subf %144, %124 : vector<8x32xf32>
    %146 = arith.mulf %145, %124 : vector<8x32xf32>
    %147 = math.exp %146 : vector<8x32xf32>
    %148 = arith.mulf %143, %147 : vector<8x32xf32>
    %cst_59 = arith.constant 1.000000e+00 : f32
    %149 = vector.broadcast %cst_59 : f32 to vector<8x32xf32>
    %150 = arith.subf %149, %148 : vector<8x32xf32>
    %cst_60 = arith.constant 0.000000e+00 : f32
    %151 = vector.broadcast %cst_60 : f32 to vector<8x32xf32>
    %152 = arith.cmpf oge, %123, %151 : vector<8x32xf32>
    %cst_61 = arith.constant 0.000000e+00 : f32
    %153 = vector.broadcast %cst_61 : f32 to vector<8x32xf32>
    %154 = arith.subf %153, %150 : vector<8x32xf32>
    %155 = arith.select %152, %150, %154 : vector<8x32xi1>, vector<8x32xf32>
    %cst_62 = arith.constant 1.000000e+00 : f32
    %156 = vector.broadcast %cst_62 : f32 to vector<8x32xf32>
    %157 = arith.addf %156, %155 : vector<8x32xf32>
    %158 = arith.mulf %121, %157 : vector<8x32xf32>
    %c0_63 = arith.constant 0 : index
    %c0_64 = arith.constant 0 : index
    %c0_65 = arith.constant 0 : index
    %159 = vector.load %arg18[%c0_63, %c0_64, %c0_65] : memref<1x8x32xf32, #tpu.memory_space<vmem>>, vector<1x8x32xf32>
    %160 = vector.shape_cast %159 : vector<1x8x32xf32> to vector<8x32xf32>
    %161 = vector.shape_cast %158 : vector<8x32xf32> to vector<1x8x32xf32>
    tpu.vector_store %arg18[%c0_63, %c0_64, %c0_65], %161 {strides = array<i32>} : memref<1x8x32xf32, #tpu.memory_space<vmem>>, vector<1x8x32xf32>,
    return
  }
  func.func @transform_0(%arg0: i32, %arg1: i32) -> (i32, i32, i32) {
    %c0_i32 = arith.constant 0 : i32
    %c0_i32_0 = arith.constant 0 : i32
    return %arg0, %arg1, %c0_i32 : i32, i32, i32
  }
  func.func @transform_1(%arg0: i32, %arg1: i32) -> (i32, i32, i32) {
    %c0_i32 = arith.constant 0 : i32
    %c0_i32_0 = arith.constant 0 : i32
    %c0_i32_1 = arith.constant 0 : i32
    return %arg0, %c0_i32, %c0_i32_0 : i32, i32, i32
  }
  func.func @transform_2(%arg0: i32, %arg1: i32) -> (i32, i32, i32) {
    %c0_i32 = arith.constant 0 : i32
    %c0_i32_0 = arith.constant 0 : i32
    %c0_i32_1 = arith.constant 0 : i32
    return %arg0, %c0_i32, %c0_i32_0 : i32, i32, i32
  }
  func.func @transform_3(%arg0: i32, %arg1: i32) -> (i32, i32) {
    %c0_i32 = arith.constant 0 : i32
    %c0_i32_0 = arith.constant 0 : i32
    %c0_i32_1 = arith.constant 0 : i32
    return %c0_i32, %c0_i32_0 : i32, i32
  }
  func.func @transform_4(%arg0: i32, %arg1: i32) -> (i32, i32) {
    %c0_i32 = arith.constant 0 : i32
    %c0_i32_0 = arith.constant 0 : i32
    %c0_i32_1 = arith.constant 0 : i32
    return %c0_i32, %c0_i32_0 : i32, i32
  }
  func.func @transform_5(%arg0: i32, %arg1: i32) -> (i32, i32) {
    %c0_i32 = arith.constant 0 : i32
    %c0_i32_0 = arith.constant 0 : i32
    %c0_i32_1 = arith.constant 0 : i32
    return %c0_i32, %c0_i32_0 : i32, i32
  }
  func.func @transform_6(%arg0: i32, %arg1: i32) -> (i32, i32) {
    %c0_i32 = arith.constant 0 : i32
    %c0_i32_0 = arith.constant 0 : i32
    %c0_i32_1 = arith.constant 0 : i32
    return %c0_i32, %c0_i32_0 : i32, i32
  }
  func.func @transform_7(%arg0: i32, %arg1: i32) -> (i32, i32) {
    %c0_i32 = arith.constant 0 : i32
    %c0_i32_0 = arith.constant 0 : i32
    %c0_i32_1 = arith.constant 0 : i32
    return %c0_i32, %c0_i32_0 : i32, i32
  }
  func.func @transform_8(%arg0: i32, %arg1: i32) -> (i32, i32) {
    %c0_i32 = arith.constant 0 : i32
    %c0_i32_0 = arith.constant 0 : i32
    %c0_i32_1 = arith.constant 0 : i32
    return %c0_i32, %c0_i32_0 : i32, i32
  }
  func.func @transform_9(%arg0: i32, %arg1: i32) -> (i32, i32) {
    %c0_i32 = arith.constant 0 : i32
    %c0_i32_0 = arith.constant 0 : i32
    %c0_i32_1 = arith.constant 0 : i32
    return %c0_i32, %c0_i32_0 : i32, i32
  }
  func.func @transform_10(%arg0: i32, %arg1: i32) -> (i32, i32) {
    %c0_i32 = arith.constant 0 : i32
    %c0_i32_0 = arith.constant 0 : i32
    %c0_i32_1 = arith.constant 0 : i32
    return %c0_i32, %c0_i32_0 : i32, i32
  }
  func.func @transform_11(%arg0: i32, %arg1: i32) -> (i32, i32) {
    %c0_i32 = arith.constant 0 : i32
    %c0_i32_0 = arith.constant 0 : i32
    %c0_i32_1 = arith.constant 0 : i32
    return %c0_i32, %c0_i32_0 : i32, i32
  }
  func.func @transform_12(%arg0: i32, %arg1: i32) -> (i32, i32) {
    %c0_i32 = arith.constant 0 : i32
    %c0_i32_0 = arith.constant 0 : i32
    %c0_i32_1 = arith.constant 0 : i32
    return %c0_i32, %c0_i32_0 : i32, i32
  }
  func.func @transform_13(%arg0: i32, %arg1: i32) -> (i32, i32) {
    %c0_i32 = arith.constant 0 : i32
    %c0_i32_0 = arith.constant 0 : i32
    %c0_i32_1 = arith.constant 0 : i32
    return %c0_i32, %c0_i32_0 : i32, i32
  }
  func.func @transform_14(%arg0: i32, %arg1: i32) -> (i32, i32) {
    %c0_i32 = arith.constant 0 : i32
    %c0_i32_0 = arith.constant 0 : i32
    %c0_i32_1 = arith.constant 0 : i32
    return %c0_i32, %c0_i32_0 : i32, i32
  }
  func.func @transform_15(%arg0: i32, %arg1: i32) -> (i32, i32) {
    %c0_i32 = arith.constant 0 : i32
    %c0_i32_0 = arith.constant 0 : i32
    %c0_i32_1 = arith.constant 0 : i32
    return %c0_i32, %c0_i32_0 : i32, i32
  }
  func.func @transform_16(%arg0: i32, %arg1: i32) -> (i32, i32, i32) {
    %c0_i32 = arith.constant 0 : i32
    %c0_i32_0 = arith.constant 0 : i32
    return %arg0, %arg1, %c0_i32 : i32, i32, i32
  }
}

</mosaic_0001>

<llo_original>
// kernel: tpu_custom_call.1
$region0: #{tpu_custom_call.1}
  #allocation0 [shape = 'u32[]', space=smem, size = 0x4, offset = 0x4, fixed_abs, tag = 'smem constant byte address 0x4 - core index']
  #allocation1 [shape = 'u32[72,128]{1,0:T(1,128)}', space=vmem, size = 0x9000, scoped, tag = 'internal scratch']
  #allocation2 [shape = 'bf16[8,32]{1,0:T(8,128)(2,1)}', space=vmem, size = 0x800, scoped, tag = 'scratch operand']
  #allocation3 [shape = 'bf16[8,32]{1,0:T(8,128)(2,1)}', space=vmem, size = 0x800, scoped, tag = 'scratch operand']
  %s0 = inlined_call_operand.hbm [shape: bf16[2,8,32], index: 0, kind: input, shape index: {}]
  %s1 = inlined_call_operand.hbm [shape: bf16[2,8,32], index: 1, kind: input, shape index: {}]
  %s2 = inlined_call_operand.hbm [shape: bf16[2,8,32], index: 2, kind: input, shape index: {}]
  %s3 = inlined_call_operand.hbm [shape: bf16[32,32], index: 3, kind: input, shape index: {}]
  %s4 = inlined_call_operand.vmem [shape: f32[1,32], index: 4, kind: input, shape index: {}]
  %s5 = inlined_call_operand.hbm [shape: bf16[32,32], index: 5, kind: input, shape index: {}]
  %s6 = inlined_call_operand.vmem [shape: f32[1,32], index: 6, kind: input, shape index: {}]
  %s7 = inlined_call_operand.hbm [shape: bf16[32,32], index: 7, kind: input, shape index: {}]
  %s8 = inlined_call_operand.vmem [shape: f32[1,32], index: 8, kind: input, shape index: {}]
  %s9 = inlined_call_operand.vmem [shape: f32[1,32], index: 9, kind: input, shape index: {}]
  %s10 = inlined_call_operand.hbm [shape: bf16[32,32], index: 10, kind: input, shape index: {}]
  %s11 = inlined_call_operand.vmem [shape: f32[1,32], index: 11, kind: input, shape index: {}]
  %s12 = inlined_call_operand.vmem [shape: f32[1,32], index: 12, kind: input, shape index: {}]
  %s13 = inlined_call_operand.vmem [shape: f32[1,32], index: 13, kind: input, shape index: {}]
  %s14 = inlined_call_operand.hbm [shape: bf16[32,32], index: 14, kind: input, shape index: {}]
  %s15 = inlined_call_operand.vmem [shape: f32[1,32], index: 15, kind: input, shape index: {}]
  %s16 = inlined_call_operand.hbm [shape: f32[2,8,32], index: 16, kind: output, shape index: {}]
  %s17 = sld [smem:[#allocation0]]
  $region133: #{tpu_custom_call.1} parent=0
    _
  %s19 = ssub.s32 1, %s17
  %s20 = scalar_select 0, %s19, %s17
  $region1: #{tpu_custom_call.1} parent=0
    #allocation4 [shape = 'u8[4096]{0}', space=vmem, size = 0x1000, scoped, tag = 'input window, operand 0']
    #allocation5 [shape = 's32[2]{0}', space=sflag, size = 0x8, scoped, tag = 'scoped memory for tpu_custom_call.1']
    #allocation6 [shape = 's32[2]{0}', space=sflag, size = 0x8, scoped, tag = 'scoped memory for tpu_custom_call.1']
    #allocation7 [shape = 'u8[4096]{0}', space=vmem, size = 0x1000, scoped, tag = 'input window, operand 1']
    #allocation8 [shape = 's32[2]{0}', space=sflag, size = 0x8, scoped, tag = 'scoped memory for tpu_custom_call.1']
    #allocation9 [shape = 'u8[4096]{0}', space=vmem, size = 0x1000, scoped, tag = 'input window, operand 2']
    #allocation10 [shape = 'u8[8192]{0}', space=vmem, size = 0x2000, scoped, tag = 'input window, operand 3, single buffered']
    #allocation11 [shape = 's32[1]{0}', space=sflag, size = 0x4, scoped, tag = 'scoped memory for tpu_custom_call.1']
    #allocation12 [shape = 'u8[8192]{0}', space=vmem, size = 0x2000, scoped, tag = 'input window, operand 5, single buffered']
    #allocation13 [shape = 'u8[8192]{0}', space=vmem, size = 0x2000, scoped, tag = 'input window, operand 7, single buffered']
    #allocation14 [shape = 's32[1]{0}', space=sflag, size = 0x4, scoped, tag = 'scoped memory for tpu_custom_call.1']
    #allocation15 [shape = 'u8[8192]{0}', space=vmem, size = 0x2000, scoped, tag = 'input window, operand 10, single buffered']
    #allocation16 [shape = 'u8[8192]{0}', space=vmem, size = 0x2000, scoped, tag = 'input window, operand 14, single buffered']
    #allocation17 [shape = 's32[1]{0}', space=sflag, size = 0x4, scoped, tag = 'scoped memory for tpu_custom_call.1']
    #allocation18 [shape = 'u8[8192]{0}', space=vmem, size = 0x2000, scoped, tag = 'output window, operand 0']
    %21 = vsyncpa [#allocation5], 0
    %s22 = scalar_lea.sflag [#allocation5], 1
    %23 = vsyncpa %s22, 0
    %24 = vsyncpa [#allocation8], 0
    %s25 = scalar_lea.sflag [#allocation8], 1
    %26 = vsyncpa %s25, 0
    %27 = vsyncpa [#allocation11], 0
    %28 = vsyncpa [#allocation14], 0
    %29 = vsyncpa [#allocation17], 0
    %30 = vsyncpa [#allocation6], 0
    %s31 = scalar_lea.sflag [#allocation6], 1
    %32 = vsyncpa %s31, 0
    loop: start=0, step=1, limit=4
    $region2: #{tpu_custom_call.1} parent=1 // loop_pre_header
      _
    $region3: #{tpu_custom_call.1} parent=1 // loop_header
      %s34 = sphi 0, %s38
      %p35 = scmp.ge.s32.totalorder %s34, 4
      %s41 = sphi 0, %s53
      %s42 = sphi 0, %s49
      %s43 = sphi 0, %s41
      %s44 = sphi 0, %s42
      %s45 = sphi 0, %s43
      %s46 = sphi 0, %s44
      %s58 = sphi 0, %s60
      %s61 = sphi 0, %s58
      %s62 = sphi 0, %s61
      %s78 = sphi 0, %s62
      %s84 = sphi 0, %s86
      %s87 = sphi 0, %s84
      %s88 = sphi 0, %s87
      %s104 = sphi 0, %s88
      %s110 = sphi 0, %s112
      %s113 = sphi 0, %s110
      %s114 = sphi 0, %s113
      %s130 = sphi 0, %s114
      %s134 = sphi 0, %s134
      %s136 = sphi 0, %s134
      %s137 = sphi 0, %s136
      %s151 = sphi 0, %s137
      %s155 = sphi 0, %s155
      %s157 = sphi 0, %s155
      %s158 = sphi 0, %s157
      %s172 = sphi 0, %s158
      %s176 = sphi 0, %s176
      %s178 = sphi 0, %s176
      %s179 = sphi 0, %s178
      %s193 = sphi 0, %s179
      %s197 = sphi 0, %s197
      %s199 = sphi 0, %s197
      %s200 = sphi 0, %s199
      %s214 = sphi 0, %s200
      %s218 = sphi 0, %s218
      %s220 = sphi 0, %s218
      %s221 = sphi 0, %s220
      %s235 = sphi 0, %s221
      %s239 = sphi 0, %s239
      %s241 = sphi 0, %s239
      %s242 = sphi 0, %s241
      %s256 = sphi 0, %s242
      %s260 = sphi 0, %s260
      %s262 = sphi 0, %s260
      %s263 = sphi 0, %s262
      %s277 = sphi 0, %s263
      %s281 = sphi 0, %s281
      %s283 = sphi 0, %s281
      %s284 = sphi 0, %s283
      %s298 = sphi 0, %s284
      %s302 = sphi 0, %s302
      %s304 = sphi 0, %s302
      %s305 = sphi 0, %s304
      %s319 = sphi 0, %s305
      %s323 = sphi 0, %s323
      %s325 = sphi 0, %s323
      %s326 = sphi 0, %s325
      %s340 = sphi 0, %s326
      %s344 = sphi 0, %s344
      %s346 = sphi 0, %s344
      %s347 = sphi 0, %s346
      %s361 = sphi 0, %s347
      %s365 = sphi 0, %s365
      %s367 = sphi 0, %s365
      %s368 = sphi 0, %s367
      %s382 = sphi 0, %s368
      %s386 = sphi 0, %s386
      %s388 = sphi 0, %s386
      %s389 = sphi 0, %s388
      %s403 = sphi 0, %s389
      %s411 = sphi 0, %s413
      %s414 = sphi 0, %s411
      %s415 = sphi 0, %s414
      %s431 = sphi 0, %s415
    $region4: #{tpu_custom_call.1} parent=1 // loop_header_branch
      %37 = sbr.rel (%p35) target = $region8
    $region5: #{tpu_custom_call.1} parent=1 // loop_body
      %s39 = ssub.s32 %s34, 1
      %s40 = ssub.s32 %s34, 2
      %s47 = sadd.s32 1, %s42
      %p48 = scmp.ge.s32.totalorder %s47, 1
      %s49 = scalar_select %p48, 0, %s47
      %s50 = sadd.s32 1, %s41
      %s51 = scalar_select %p48, %s50, %s41
      %p52 = scmp.ge.s32.totalorder %s51, 2
      %s53 = scalar_select %p52, 0, %s51
      %s54 = ssub.s32 %s41, %s53
      %s55 = ssub.s32 %s42, %s49
      %s56 = sor.u32 %s54, %s55
      %p57 = scmp.eq.s32.totalorder %s56, 0
      %s59 = sadd.s32 %s58, 1
      %s60 = scalar_select %p57, %s58, %s59
      %p63 = pneg %p57
      %p64 = scmp.eq.s32.totalorder %s34, 1
      %p65 = por %p63, %p64
      %p66 = scmp.ne.s32.totalorder %s58, %s61
      %p67 = scmp.eq.s32.totalorder %s34, 0
      %p68 = por %p66, %p67
      %p69 = scmp.ne.s32.totalorder %s58, %s61
      %p70 = scmp.eq.s32.totalorder %s39, 1
      %p71 = por %p69, %p70
      %p72 = scmp.ne.s32.totalorder %s61, %s62
      %p73 = scmp.eq.s32.totalorder %s39, 0
      %p74 = por %p72, %p73
      %p75 = scmp.ne.s32.totalorder %s61, %s62
      %p76 = scmp.eq.s32.totalorder %s40, 1
      %p77 = por %p75, %p76
      %p79 = scmp.ne.s32.totalorder %s62, %s78
      %p80 = scmp.eq.s32.totalorder %s40, 0
      %p81 = por %p79, %p80
      %s82 = ssub.s32 %s41, %s53
      %p83 = scmp.eq.s32.totalorder %s82, 0
      %s85 = sadd.s32 %s84, 1
      %s86 = scalar_select %p83, %s84, %s85
      %p89 = pneg %p83
      %p90 = scmp.eq.s32.totalorder %s34, 1
      %p91 = por %p89, %p90
      %p92 = scmp.ne.s32.totalorder %s84, %s87
      %p93 = scmp.eq.s32.totalorder %s34, 0
      %p94 = por %p92, %p93
      %p95 = scmp.ne.s32.totalorder %s84, %s87
      %p96 = scmp.eq.s32.totalorder %s39, 1
      %p97 = por %p95, %p96
      %p98 = scmp.ne.s32.totalorder %s87, %s88
      %p99 = scmp.eq.s32.totalorder %s39, 0
      %p100 = por %p98, %p99
      %p101 = scmp.ne.s32.totalorder %s87, %s88
      %p102 = scmp.eq.s32.totalorder %s40, 1
      %p103 = por %p101, %p102
      %p105 = scmp.ne.s32.totalorder %s88, %s104
      %p106 = scmp.eq.s32.totalorder %s40, 0
      %p107 = por %p105, %p106
      %s108 = ssub.s32 %s41, %s53
      %p109 = scmp.eq.s32.totalorder %s108, 0
      %s111 = sadd.s32 %s110, 1
      %s112 = scalar_select %p109, %s110, %s111
      %p115 = pneg %p109
      %p116 = scmp.eq.s32.totalorder %s34, 1
      %p117 = por %p115, %p116
      %p118 = scmp.ne.s32.totalorder %s110, %s113
      %p119 = scmp.eq.s32.totalorder %s34, 0
      %p120 = por %p118, %p119
      %p121 = scmp.ne.s32.totalorder %s110, %s113
      %p122 = scmp.eq.s32.totalorder %s39, 1
      %p123 = por %p121, %p122
      %p124 = scmp.ne.s32.totalorder %s113, %s114
      %p125 = scmp.eq.s32.totalorder %s39, 0
      %p126 = por %p124, %p125
      %p127 = scmp.ne.s32.totalorder %s113, %s114
      %p128 = scmp.eq.s32.totalorder %s40, 1
      %p129 = por %p127, %p128
      %p131 = scmp.ne.s32.totalorder %s114, %s130
      %p132 = scmp.eq.s32.totalorder %s40, 0
      %p133 = por %p131, %p132
      %s135 = sadd.s32 %s134, 1
      %p138 = scmp.eq.s32.totalorder %s34, 1
      %p139 = scmp.ne.s32.totalorder %s134, %s136
      %p140 = scmp.eq.s32.totalorder %s34, 0
      %p141 = por %p139, %p140
      %p142 = scmp.ne.s32.totalorder %s134, %s136
      %p143 = scmp.eq.s32.totalorder %s39, 1
      %p144 = por %p142, %p143
      %p145 = scmp.ne.s32.totalorder %s136, %s137
      %p146 = scmp.eq.s32.totalorder %s39, 0
      %p147 = por %p145, %p146
      %p148 = scmp.ne.s32.totalorder %s136, %s137
      %p149 = scmp.eq.s32.totalorder %s40, 1
      %p150 = por %p148, %p149
      %p152 = scmp.ne.s32.totalorder %s137, %s151
      %p153 = scmp.eq.s32.totalorder %s40, 0
      %p154 = por %p152, %p153
      %s156 = sadd.s32 %s155, 1
      %p159 = scmp.eq.s32.totalorder %s34, 1
      %p160 = scmp.ne.s32.totalorder %s155, %s157
      %p161 = scmp.eq.s32.totalorder %s34, 0
      %p162 = por %p160, %p161
      %p163 = scmp.ne.s32.totalorder %s155, %s157
      %p164 = scmp.eq.s32.totalorder %s39, 1
      %p165 = por %p163, %p164
      %p166 = scmp.ne.s32.totalorder %s157, %s158
      %p167 = scmp.eq.s32.totalorder %s39, 0
      %p168 = por %p166, %p167
      %p169 = scmp.ne.s32.totalorder %s157, %s158
      %p170 = scmp.eq.s32.totalorder %s40, 1
      %p171 = por %p169, %p170
      %p173 = scmp.ne.s32.totalorder %s158, %s172
      %p174 = scmp.eq.s32.totalorder %s40, 0
      %p175 = por %p173, %p174
      %s177 = sadd.s32 %s176, 1
      %p180 = scmp.eq.s32.totalorder %s34, 1
      %p181 = scmp.ne.s32.totalorder %s176, %s178
      %p182 = scmp.eq.s32.totalorder %s34, 0
      %p183 = por %p181, %p182
      %p184 = scmp.ne.s32.totalorder %s176, %s178
      %p185 = scmp.eq.s32.totalorder %s39, 1
      %p186 = por %p184, %p185
      %p187 = scmp.ne.s32.totalorder %s178, %s179
      %p188 = scmp.eq.s32.totalorder %s39, 0
      %p189 = por %p187, %p188
      %p190 = scmp.ne.s32.totalorder %s178, %s179
      %p191 = scmp.eq.s32.totalorder %s40, 1
      %p192 = por %p190, %p191
      %p194 = scmp.ne.s32.totalorder %s179, %s193
      %p195 = scmp.eq.s32.totalorder %s40, 0
      %p196 = por %p194, %p195
      %s198 = sadd.s32 %s197, 1
      %p201 = scmp.eq.s32.totalorder %s34, 1
      %p202 = scmp.ne.s32.totalorder %s197, %s199
      %p203 = scmp.eq.s32.totalorder %s34, 0
      %p204 = por %p202, %p203
      %p205 = scmp.ne.s32.totalorder %s197, %s199
      %p206 = scmp.eq.s32.totalorder %s39, 1
      %p207 = por %p205, %p206
      %p208 = scmp.ne.s32.totalorder %s199, %s200
      %p209 = scmp.eq.s32.totalorder %s39, 0
      %p210 = por %p208, %p209
      %p211 = scmp.ne.s32.totalorder %s199, %s200
      %p212 = scmp.eq.s32.totalorder %s40, 1
      %p213 = por %p211, %p212
      %p215 = scmp.ne.s32.totalorder %s200, %s214
      %p216 = scmp.eq.s32.totalorder %s40, 0
      %p217 = por %p215, %p216
      %s219 = sadd.s32 %s218, 1
      %p222 = scmp.eq.s32.totalorder %s34, 1
      %p223 = scmp.ne.s32.totalorder %s218, %s220
      %p224 = scmp.eq.s32.totalorder %s34, 0
      %p225 = por %p223, %p224
      %p226 = scmp.ne.s32.totalorder %s218, %s220
      %p227 = scmp.eq.s32.totalorder %s39, 1
      %p228 = por %p226, %p227
      %p229 = scmp.ne.s32.totalorder %s220, %s221
      %p230 = scmp.eq.s32.totalorder %s39, 0
      %p231 = por %p229, %p230
      %p232 = scmp.ne.s32.totalorder %s220, %s221
      %p233 = scmp.eq.s32.totalorder %s40, 1
      %p234 = por %p232, %p233
      %p236 = scmp.ne.s32.totalorder %s221, %s235
      %p237 = scmp.eq.s32.totalorder %s40, 0
      %p238 = por %p236, %p237
      %s240 = sadd.s32 %s239, 1
      %p243 = scmp.eq.s32.totalorder %s34, 1
      %p244 = scmp.ne.s32.totalorder %s239, %s241
      %p245 = scmp.eq.s32.totalorder %s34, 0
      %p246 = por %p244, %p245
      %p247 = scmp.ne.s32.totalorder %s239, %s241
      %p248 = scmp.eq.s32.totalorder %s39, 1
      %p249 = por %p247, %p248
      %p250 = scmp.ne.s32.totalorder %s241, %s242
      %p251 = scmp.eq.s32.totalorder %s39, 0
      %p252 = por %p250, %p251
      %p253 = scmp.ne.s32.totalorder %s241, %s242
      %p254 = scmp.eq.s32.totalorder %s40, 1
      %p255 = por %p253, %p254
      %p257 = scmp.ne.s32.totalorder %s242, %s256
      %p258 = scmp.eq.s32.totalorder %s40, 0
      %p259 = por %p257, %p258
      %s261 = sadd.s32 %s260, 1
      %p264 = scmp.eq.s32.totalorder %s34, 1
      %p265 = scmp.ne.s32.totalorder %s260, %s262
      %p266 = scmp.eq.s32.totalorder %s34, 0
      %p267 = por %p265, %p266
      %p268 = scmp.ne.s32.totalorder %s260, %s262
      %p269 = scmp.eq.s32.totalorder %s39, 1
      %p270 = por %p268, %p269
      %p271 = scmp.ne.s32.totalorder %s262, %s263
      %p272 = scmp.eq.s32.totalorder %s39, 0
      %p273 = por %p271, %p272
      %p274 = scmp.ne.s32.totalorder %s262, %s263
      %p275 = scmp.eq.s32.totalorder %s40, 1
      %p276 = por %p274, %p275
      %p278 = scmp.ne.s32.totalorder %s263, %s277
      %p279 = scmp.eq.s32.totalorder %s40, 0
      %p280 = por %p278, %p279
      %s282 = sadd.s32 %s281, 1
      %p285 = scmp.eq.s32.totalorder %s34, 1
      %p286 = scmp.ne.s32.totalorder %s281, %s283
      %p287 = scmp.eq.s32.totalorder %s34, 0
      %p288 = por %p286, %p287
      %p289 = scmp.ne.s32.totalorder %s281, %s283
      %p290 = scmp.eq.s32.totalorder %s39, 1
      %p291 = por %p289, %p290
      %p292 = scmp.ne.s32.totalorder %s283, %s284
      %p293 = scmp.eq.s32.totalorder %s39, 0
      %p294 = por %p292, %p293
      %p295 = scmp.ne.s32.totalorder %s283, %s284
      %p296 = scmp.eq.s32.totalorder %s40, 1
      %p297 = por %p295, %p296
      %p299 = scmp.ne.s32.totalorder %s284, %s298
      %p300 = scmp.eq.s32.totalorder %s40, 0
      %p301 = por %p299, %p300
      %s303 = sadd.s32 %s302, 1
      %p306 = scmp.eq.s32.totalorder %s34, 1
      %p307 = scmp.ne.s32.totalorder %s302, %s304
      %p308 = scmp.eq.s32.totalorder %s34, 0
      %p309 = por %p307, %p308
      %p310 = scmp.ne.s32.totalorder %s302, %s304
      %p311 = scmp.eq.s32.totalorder %s39, 1
      %p312 = por %p310, %p311
      %p313 = scmp.ne.s32.totalorder %s304, %s305
      %p314 = scmp.eq.s32.totalorder %s39, 0
      %p315 = por %p313, %p314
      %p316 = scmp.ne.s32.totalorder %s304, %s305
      %p317 = scmp.eq.s32.totalorder %s40, 1
      %p318 = por %p316, %p317
      %p320 = scmp.ne.s32.totalorder %s305, %s319
      %p321 = scmp.eq.s32.totalorder %s40, 0
      %p322 = por %p320, %p321
      %s324 = sadd.s32 %s323, 1
      %p327 = scmp.eq.s32.totalorder %s34, 1
      %p328 = scmp.ne.s32.totalorder %s323, %s325
      %p329 = scmp.eq.s32.totalorder %s34, 0
      %p330 = por %p328, %p329
      %p331 = scmp.ne.s32.totalorder %s323, %s325
      %p332 = scmp.eq.s32.totalorder %s39, 1
      %p333 = por %p331, %p332
      %p334 = scmp.ne.s32.totalorder %s325, %s326
      %p335 = scmp.eq.s32.totalorder %s39, 0
      %p336 = por %p334, %p335
      %p337 = scmp.ne.s32.totalorder %s325, %s326
      %p338 = scmp.eq.s32.totalorder %s40, 1
      %p339 = por %p337, %p338
      %p341 = scmp.ne.s32.totalorder %s326, %s340
      %p342 = scmp.eq.s32.totalorder %s40, 0
      %p343 = por %p341, %p342
      %s345 = sadd.s32 %s344, 1
      %p348 = scmp.eq.s32.totalorder %s34, 1
      %p349 = scmp.ne.s32.totalorder %s344, %s346
      %p350 = scmp.eq.s32.totalorder %s34, 0
      %p351 = por %p349, %p350
      %p352 = scmp.ne.s32.totalorder %s344, %s346
      %p353 = scmp.eq.s32.totalorder %s39, 1
      %p354 = por %p352, %p353
      %p355 = scmp.ne.s32.totalorder %s346, %s347
      %p356 = scmp.eq.s32.totalorder %s39, 0
      %p357 = por %p355, %p356
      %p358 = scmp.ne.s32.totalorder %s346, %s347
      %p359 = scmp.eq.s32.totalorder %s40, 1
      %p360 = por %p358, %p359
      %p362 = scmp.ne.s32.totalorder %s347, %s361
      %p363 = scmp.eq.s32.totalorder %s40, 0
      %p364 = por %p362, %p363
      %s366 = sadd.s32 %s365, 1
      %p369 = scmp.eq.s32.totalorder %s34, 1
      %p370 = scmp.ne.s32.totalorder %s365, %s367
      %p371 = scmp.eq.s32.totalorder %s34, 0
      %p372 = por %p370, %p371
      %p373 = scmp.ne.s32.totalorder %s365, %s367
      %p374 = scmp.eq.s32.totalorder %s39, 1
      %p375 = por %p373, %p374
      %p376 = scmp.ne.s32.totalorder %s367, %s368
      %p377 = scmp.eq.s32.totalorder %s39, 0
      %p378 = por %p376, %p377
      %p379 = scmp.ne.s32.totalorder %s367, %s368
      %p380 = scmp.eq.s32.totalorder %s40, 1
      %p381 = por %p379, %p380
      %p383 = scmp.ne.s32.totalorder %s368, %s382
      %p384 = scmp.eq.s32.totalorder %s40, 0
      %p385 = por %p383, %p384
      %s387 = sadd.s32 %s386, 1
      %p390 = scmp.eq.s32.totalorder %s34, 1
      %p391 = scmp.ne.s32.totalorder %s386, %s388
      %p392 = scmp.eq.s32.totalorder %s34, 0
      %p393 = por %p391, %p392
      %p394 = scmp.ne.s32.totalorder %s386, %s388
      %p395 = scmp.eq.s32.totalorder %s39, 1
      %p396 = por %p394, %p395
      %p397 = scmp.ne.s32.totalorder %s388, %s389
      %p398 = scmp.eq.s32.totalorder %s39, 0
      %p399 = por %p397, %p398
      %p400 = scmp.ne.s32.totalorder %s388, %s389
      %p401 = scmp.eq.s32.totalorder %s40, 1
      %p402 = por %p400, %p401
      %p404 = scmp.ne.s32.totalorder %s389, %s403
      %p405 = scmp.eq.s32.totalorder %s40, 0
      %p406 = por %p404, %p405
      %s407 = ssub.s32 %s41, %s53
      %s408 = ssub.s32 %s42, %s49
      %s409 = sor.u32 %s407, %s408
      %p410 = scmp.eq.s32.totalorder %s409, 0
      %s412 = sadd.s32 %s411, 1
      %s413 = scalar_select %p410, %s411, %s412
      %p416 = pneg %p410
      %p417 = scmp.eq.s32.totalorder %s34, 1
      %p418 = por %p416, %p417
      %p419 = scmp.ne.s32.totalorder %s411, %s414
      %p420 = scmp.eq.s32.totalorder %s34, 0
      %p421 = por %p419, %p420
      %p422 = scmp.ne.s32.totalorder %s411, %s414
      %p423 = scmp.eq.s32.totalorder %s39, 1
      %p424 = por %p422, %p423
      %p425 = scmp.ne.s32.totalorder %s414, %s415
      %p426 = scmp.eq.s32.totalorder %s39, 0
      %p427 = por %p425, %p426
      %p428 = scmp.ne.s32.totalorder %s414, %s415
      %p429 = scmp.eq.s32.totalorder %s40, 1
      %p430 = por %p428, %p429
      %p432 = scmp.ne.s32.totalorder %s415, %s431
      %p433 = scmp.eq.s32.totalorder %s40, 0
      %p434 = por %p432, %p433
      %p435 = scmp.le.s32.totalorder 1, %s34
      %p436 = scmp.lt.s32.totalorder %s34, 3
      %p437 = pnand %p435, %p436
      %p438 = pneg %p437
      // Predicated region
      $region9: #{tpu_custom_call.1} parent=5 // pred_check
        _
      $region10: #{tpu_custom_call.1} parent=5 // pred_check_branch
        %440 = sbr.rel (%p437) target = $region12
      $region11: #{tpu_custom_call.1} parent=5 // pred_region
        %s441 = ssub.s32 %s34, 1
        // Predicated region
        $region13: #{tpu_custom_call.1} parent=11 // pred_check
          %p442 = pneg %p147
        $region14: #{tpu_custom_call.1} parent=11 // pred_check_branch
          %444 = sbr.rel (%p442) target = $region16
        $region15: #{tpu_custom_call.1} parent=11 // pred_region
          %446 = vsyncadd [#allocation11], 0
          %s447 = sshll.u32 %s3, 4
          %s448 = int_to_ptr.hbm [resolvable:$true] %s447
          %s449 = sshll.u32 [#allocation10], 4
          %s450 = int_to_ptr.vmem [resolvable:$true] %s449
          %455 = dma.hbm_to_vmem [thread:$0]  %s448, 256, %s450, [#allocation11], 64, 64, 4
        $region16: #{tpu_custom_call.1} parent=11 // pred_fallthru
          _
        // Predicated region
        $region17: #{tpu_custom_call.1} parent=11 // pred_check
          %p456 = pneg %p168
        $region18: #{tpu_custom_call.1} parent=11 // pred_check_branch
          %458 = sbr.rel (%p456) target = $region20
        $region19: #{tpu_custom_call.1} parent=11 // pred_region
          _
        $region20: #{tpu_custom_call.1} parent=11 // pred_fallthru
          _
        // Predicated region
        $region21: #{tpu_custom_call.1} parent=11 // pred_check
          %p459 = pneg %p189
        $region22: #{tpu_custom_call.1} parent=11 // pred_check_branch
          %461 = sbr.rel (%p459) target = $region24
        $region23: #{tpu_custom_call.1} parent=11 // pred_region
          %463 = vsyncadd [#allocation11], 0
          %s464 = sshll.u32 %s5, 4
          %s465 = int_to_ptr.hbm [resolvable:$true] %s464
          %s466 = sshll.u32 [#allocation12], 4
          %s467 = int_to_ptr.vmem [resolvable:$true] %s466
          %472 = dma.hbm_to_vmem [thread:$0]  %s465, 256, %s467, [#allocation11], 64, 64, 4
        $region24: #{tpu_custom_call.1} parent=11 // pred_fallthru
          _
        // Predicated region
        $region25: #{tpu_custom_call.1} parent=11 // pred_check
          %p473 = pneg %p210
        $region26: #{tpu_custom_call.1} parent=11 // pred_check_branch
          %475 = sbr.rel (%p473) target = $region28
        $region27: #{tpu_custom_call.1} parent=11 // pred_region
          _
        $region28: #{tpu_custom_call.1} parent=11 // pred_fallthru
          _
        // Predicated region
        $region29: #{tpu_custom_call.1} parent=11 // pred_check
          %p476 = pneg %p231
        $region30: #{tpu_custom_call.1} parent=11 // pred_check_branch
          %478 = sbr.rel (%p476) target = $region32
        $region31: #{tpu_custom_call.1} parent=11 // pred_region
          %480 = vsyncadd [#allocation14], 0
          %s481 = sshll.u32 %s7, 4
          %s482 = int_to_ptr.hbm [resolvable:$true] %s481
          %s483 = sshll.u32 [#allocation13], 4
          %s484 = int_to_ptr.vmem [resolvable:$true] %s483
          %489 = dma.hbm_to_vmem [thread:$0]  %s482, 256, %s484, [#allocation14], 64, 64, 4
        $region32: #{tpu_custom_call.1} parent=11 // pred_fallthru
          _
        // Predicated region
        $region33: #{tpu_custom_call.1} parent=11 // pred_check
          %p490 = pneg %p252
        $region34: #{tpu_custom_call.1} parent=11 // pred_check_branch
          %492 = sbr.rel (%p490) target = $region36
        $region35: #{tpu_custom_call.1} parent=11 // pred_region
          _
        $region36: #{tpu_custom_call.1} parent=11 // pred_fallthru
          _
        // Predicated region
        $region37: #{tpu_custom_call.1} parent=11 // pred_check
          %p493 = pneg %p273
        $region38: #{tpu_custom_call.1} parent=11 // pred_check_branch
          %495 = sbr.rel (%p493) target = $region40
        $region39: #{tpu_custom_call.1} parent=11 // pred_region
          _
        $region40: #{tpu_custom_call.1} parent=11 // pred_fallthru
          _
        // Predicated region
        $region41: #{tpu_custom_call.1} parent=11 // pred_check
          %p496 = pneg %p294
        $region42: #{tpu_custom_call.1} parent=11 // pred_check_branch
          %498 = sbr.rel (%p496) target = $region44
        $region43: #{tpu_custom_call.1} parent=11 // pred_region
          %500 = vsyncadd [#allocation14], 0
          %s501 = sshll.u32 %s10, 4
          %s502 = int_to_ptr.hbm [resolvable:$true] %s501
          %s503 = sshll.u32 [#allocation15], 4
          %s504 = int_to_ptr.vmem [resolvable:$true] %s503
          %509 = dma.hbm_to_vmem [thread:$0]  %s502, 256, %s504, [#allocation14], 64, 64, 4
        $region44: #{tpu_custom_call.1} parent=11 // pred_fallthru
          _
        // Predicated region
        $region45: #{tpu_custom_call.1} parent=11 // pred_check
          %p510 = pneg %p315
        $region46: #{tpu_custom_call.1} parent=11 // pred_check_branch
          %512 = sbr.rel (%p510) target = $region48
        $region47: #{tpu_custom_call.1} parent=11 // pred_region
          _
        $region48: #{tpu_custom_call.1} parent=11 // pred_fallthru
          _
        // Predicated region
        $region49: #{tpu_custom_call.1} parent=11 // pred_check
          %p513 = pneg %p336
        $region50: #{tpu_custom_call.1} parent=11 // pred_check_branch
          %515 = sbr.rel (%p513) target = $region52
        $region51: #{tpu_custom_call.1} parent=11 // pred_region
          _
        $region52: #{tpu_custom_call.1} parent=11 // pred_fallthru
          _
        // Predicated region
        $region53: #{tpu_custom_call.1} parent=11 // pred_check
          %p516 = pneg %p357
        $region54: #{tpu_custom_call.1} parent=11 // pred_check_branch
          %518 = sbr.rel (%p516) target = $region56
        $region55: #{tpu_custom_call.1} parent=11 // pred_region
          _
        $region56: #{tpu_custom_call.1} parent=11 // pred_fallthru
          _
        // Predicated region
        $region57: #{tpu_custom_call.1} parent=11 // pred_check
          %p519 = pneg %p378
        $region58: #{tpu_custom_call.1} parent=11 // pred_check_branch
          %521 = sbr.rel (%p519) target = $region60
        $region59: #{tpu_custom_call.1} parent=11 // pred_region
          %523 = vsyncadd [#allocation17], 0
          %s524 = sshll.u32 %s14, 4
          %s525 = int_to_ptr.hbm [resolvable:$true] %s524
          %s526 = sshll.u32 [#allocation16], 4
          %s527 = int_to_ptr.vmem [resolvable:$true] %s526
          %532 = dma.hbm_to_vmem [thread:$0]  %s525, 256, %s527, [#allocation17], 64, 64, 4
        $region60: #{tpu_custom_call.1} parent=11 // pred_fallthru
          _
        // Predicated region
        $region61: #{tpu_custom_call.1} parent=11 // pred_check
          %p533 = pneg %p399
        $region62: #{tpu_custom_call.1} parent=11 // pred_check_branch
          %535 = sbr.rel (%p533) target = $region64
        $region63: #{tpu_custom_call.1} parent=11 // pred_region
          _
        $region64: #{tpu_custom_call.1} parent=11 // pred_fallthru
          _
      $region12: #{tpu_custom_call.1} parent=5 // pred_fallthru
        _
      %p536 = scmp.lt.s32.totalorder %s34, 2
      // Predicated region
      $region65: #{tpu_custom_call.1} parent=5 // pred_check
        %p537 = pneg %p536
      $region66: #{tpu_custom_call.1} parent=5 // pred_check_branch
        %539 = sbr.rel (%p537) target = $region68
      $region67: #{tpu_custom_call.1} parent=5 // pred_region
        // Predicated region
        $region69: #{tpu_custom_call.1} parent=67 // pred_check
          %p540 = pneg %p68
        $region70: #{tpu_custom_call.1} parent=67 // pred_check_branch
          %542 = sbr.rel (%p540) target = $region72
        $region71: #{tpu_custom_call.1} parent=67 // pred_region
          %s543 = sand.u32 %s58, 1
          %s544 = scalar_lea.sflag [#allocation5], %s543
          %s545 = sand.u32 %s58, 1
          %s546 = smul.addr %s545, 4
          %s547 = scalar_lea.vmem [#allocation4], %s546
          %549 = vsyncadd %s544, 0
          %s550 = sadd.s32 %s42, %s41
          %s551 = smul.addr %s550, 4
          %s552 = scalar_lea.hbm %s0, %s551
          %s554 = sshll.u32 %s552, 4
          %s555 = int_to_ptr.hbm [resolvable:$true] %s554
          %s556 = sshll.u32 %s547, 4
          %s557 = int_to_ptr.vmem [resolvable:$true] %s556
          %559 = dma.hbm_to_vmem [thread:$0]  %s555, 64, %s557, %s544
        $region72: #{tpu_custom_call.1} parent=67 // pred_fallthru
          _
        // Predicated region
        $region73: #{tpu_custom_call.1} parent=67 // pred_check
          %p560 = pneg %p94
        $region74: #{tpu_custom_call.1} parent=67 // pred_check_branch
          %562 = sbr.rel (%p560) target = $region76
        $region75: #{tpu_custom_call.1} parent=67 // pred_region
          %s563 = sand.u32 %s34, 1
          %s564 = scalar_lea.sflag [#allocation8], %s563
          %s565 = sand.u32 %s84, 1
          %s566 = smul.addr %s565, 4
          %s567 = scalar_lea.vmem [#allocation7], %s566
          %569 = vsyncadd %s564, 0
          %s570 = smul.addr %s41, 4
          %s571 = scalar_lea.hbm %s1, %s570
          %s573 = sshll.u32 %s571, 4
          %s574 = int_to_ptr.hbm [resolvable:$true] %s573
          %s575 = sshll.u32 %s567, 4
          %s576 = int_to_ptr.vmem [resolvable:$true] %s575
          %578 = dma.hbm_to_vmem [thread:$0]  %s574, 64, %s576, %s564
        $region76: #{tpu_custom_call.1} parent=67 // pred_fallthru
          _
        // Predicated region
        $region77: #{tpu_custom_call.1} parent=67 // pred_check
          %p579 = pneg %p120
        $region78: #{tpu_custom_call.1} parent=67 // pred_check_branch
          %581 = sbr.rel (%p579) target = $region80
        $region79: #{tpu_custom_call.1} parent=67 // pred_region
          %s582 = sand.u32 %s34, 1
          %s583 = scalar_lea.sflag [#allocation8], %s582
          %s584 = sand.u32 %s110, 1
          %s585 = smul.addr %s584, 4
          %s586 = scalar_lea.vmem [#allocation9], %s585
          %588 = vsyncadd %s583, 0
          %s589 = smul.addr %s41, 4
          %s590 = scalar_lea.hbm %s2, %s589
          %s592 = sshll.u32 %s590, 4
          %s593 = int_to_ptr.hbm [resolvable:$true] %s592
          %s594 = sshll.u32 %s586, 4
          %s595 = int_to_ptr.vmem [resolvable:$true] %s594
          %597 = dma.hbm_to_vmem [thread:$0]  %s593, 64, %s595, %s583
        $region80: #{tpu_custom_call.1} parent=67 // pred_fallthru
          _
      $region68: #{tpu_custom_call.1} parent=5 // pred_fallthru
        _
      %p598 = scmp.le.s32.totalorder 1, %s34
      %p599 = scmp.lt.s32.totalorder %s34, 3
      %p600 = pnand %p598, %p599
      %p601 = pneg %p600
      // Predicated region
      $region81: #{tpu_custom_call.1} parent=5 // pred_check
        _
      $region82: #{tpu_custom_call.1} parent=5 // pred_check_branch
        %603 = sbr.rel (%p600) target = $region84
      $region83: #{tpu_custom_call.1} parent=5 // pred_region
        %s604 = ssub.s32 %s34, 1
        %s605 = sand.u32 %s61, 1
        %s606 = scalar_lea.sflag [#allocation5], %s605
        %s607 = sand.u32 %s61, 1
        %s608 = smul.addr %s607, 4
        %s609 = scalar_lea.vmem [#allocation4], %s608
        // Predicated region
        $region85: #{tpu_custom_call.1} parent=83 // pred_check
          %p610 = pneg %p74
        $region86: #{tpu_custom_call.1} parent=83 // pred_check_branch
          %612 = sbr.rel (%p610) target = $region88
        $region87: #{tpu_custom_call.1} parent=83 // pred_region
          %614 = dma.done %s606, 64
        $region88: #{tpu_custom_call.1} parent=83 // pred_fallthru
          _
        %s615 = sand.u32 %s39, 1
        %s616 = scalar_lea.sflag [#allocation8], %s615
        %s617 = sand.u32 %s87, 1
        %s618 = smul.addr %s617, 4
        %s619 = scalar_lea.vmem [#allocation7], %s618
        // Predicated region
        $region89: #{tpu_custom_call.1} parent=83 // pred_check
          %p620 = pneg %p100
        $region90: #{tpu_custom_call.1} parent=83 // pred_check_branch
          %622 = sbr.rel (%p620) target = $region92
        $region91: #{tpu_custom_call.1} parent=83 // pred_region
          %624 = dma.done %s616, 64
        $region92: #{tpu_custom_call.1} parent=83 // pred_fallthru
          _
        %s625 = sand.u32 %s39, 1
        %s626 = scalar_lea.sflag [#allocation8], %s625
        %s627 = sand.u32 %s113, 1
        %s628 = smul.addr %s627, 4
        %s629 = scalar_lea.vmem [#allocation9], %s628
        // Predicated region
        $region93: #{tpu_custom_call.1} parent=83 // pred_check
          %p630 = pneg %p126
        $region94: #{tpu_custom_call.1} parent=83 // pred_check_branch
          %632 = sbr.rel (%p630) target = $region96
        $region95: #{tpu_custom_call.1} parent=83 // pred_region
          %634 = dma.done %s626, 64
        $region96: #{tpu_custom_call.1} parent=83 // pred_fallthru
          _
        // Predicated region
        $region97: #{tpu_custom_call.1} parent=83 // pred_check
          %p635 = pneg %p147
        $region98: #{tpu_custom_call.1} parent=83 // pred_check_branch
          %637 = sbr.rel (%p635) target = $region100
        $region99: #{tpu_custom_call.1} parent=83 // pred_region
          %639 = dma.done [#allocation11], 256
        $region100: #{tpu_custom_call.1} parent=83 // pred_fallthru
          _
        // Predicated region
        $region101: #{tpu_custom_call.1} parent=83 // pred_check
          %p640 = pneg %p189
        $region102: #{tpu_custom_call.1} parent=83 // pred_check_branch
          %642 = sbr.rel (%p640) target = $region104
        $region103: #{tpu_custom_call.1} parent=83 // pred_region
          %644 = dma.done [#allocation11], 256
        $region104: #{tpu_custom_call.1} parent=83 // pred_fallthru
          _
        // Predicated region
        $region105: #{tpu_custom_call.1} parent=83 // pred_check
          %p645 = pneg %p231
        $region106: #{tpu_custom_call.1} parent=83 // pred_check_branch
          %647 = sbr.rel (%p645) target = $region108
        $region107: #{tpu_custom_call.1} parent=83 // pred_region
          %649 = dma.done [#allocation14], 256
        $region108: #{tpu_custom_call.1} parent=83 // pred_fallthru
          _
        // Predicated region
        $region109: #{tpu_custom_call.1} parent=83 // pred_check
          %p650 = pneg %p294
        $region110: #{tpu_custom_call.1} parent=83 // pred_check_branch
          %652 = sbr.rel (%p650) target = $region112
        $region111: #{tpu_custom_call.1} parent=83 // pred_region
          %654 = dma.done [#allocation14], 256
        $region112: #{tpu_custom_call.1} parent=83 // pred_fallthru
          _
        // Predicated region
        $region113: #{tpu_custom_call.1} parent=83 // pred_check
          %p655 = pneg %p378
        $region114: #{tpu_custom_call.1} parent=83 // pred_check_branch
          %657 = sbr.rel (%p655) target = $region116
        $region115: #{tpu_custom_call.1} parent=83 // pred_region
          %659 = dma.done [#allocation17], 256
        $region116: #{tpu_custom_call.1} parent=83 // pred_fallthru
          _
        %s660 = sand.u32 %s61, 1
        %s661 = scalar_lea.sflag [#allocation5], %s660
        %s662 = sand.u32 %s61, 1
        %s663 = smul.addr %s662, 4
        %s664 = scalar_lea.vmem [#allocation4], %s663
        %p665 = pneg %p74
        %p666 = pneg %p71
        %s667 = sand.u32 %s39, 1
        %s668 = scalar_lea.sflag [#allocation8], %s667
        %s669 = sand.u32 %s87, 1
        %s670 = smul.addr %s669, 4
        %s671 = scalar_lea.vmem [#allocation7], %s670
        %p672 = pneg %p100
        %p673 = pneg %p97
        %s674 = sand.u32 %s39, 1
        %s675 = scalar_lea.sflag [#allocation8], %s674
        %s676 = sand.u32 %s113, 1
        %s677 = smul.addr %s676, 4
        %s678 = scalar_lea.vmem [#allocation9], %s677
        %p679 = pneg %p126
        %p680 = pneg %p123
        %p681 = pneg %p147
        %p682 = pneg %p144
        %p683 = pneg %p168
        %p684 = pneg %p165
        %p685 = pneg %p189
        %p686 = pneg %p186
        %p687 = pneg %p210
        %p688 = pneg %p207
        %p689 = pneg %p231
        %p690 = pneg %p228
        %p691 = pneg %p252
        %p692 = pneg %p249
        %p693 = pneg %p273
        %p694 = pneg %p270
        %p695 = pneg %p294
        %p696 = pneg %p291
        %p697 = pneg %p315
        %p698 = pneg %p312
        %p699 = pneg %p336
        %p700 = pneg %p333
        %p701 = pneg %p357
        %p702 = pneg %p354
        %p703 = pneg %p378
        %p704 = pneg %p375
        %p705 = pneg %p399
        %p706 = pneg %p396
        %p707 = pneg %p427
        %p708 = pneg %p424
        %s709 = sand.u32 %s414, 1
        %s710 = scalar_lea.sflag [#allocation6], %s709
        %s711 = sand.u32 %s414, 1
        %s712 = smul.addr %s711, 8
        %s713 = scalar_lea.vmem [#allocation18], %s712
        %p715 = scmp.eq.s32.totalorder %s44, 0
        // Predicated region
        $region117: #{tpu_custom_call.1} parent=83 // pred_check
          %p716 = pneg %p715
        $region118: #{tpu_custom_call.1} parent=83 // pred_check_branch
          %718 = sbr.rel (%p716) target = $region120
        $region119: #{tpu_custom_call.1} parent=83 // pred_region
          %v719 = vld [vmem:[%s619] sm:$0xf]
          %v720 = vld [vmem:[%s629] sm:$0xf]
          %v721 = vld [vmem:[#allocation12] sm:$0xf]
          %v722 = vld [vmem:[#allocation12 + $0x4] sm:$0xf]
          %v723 = vld [vmem:[#allocation12 + $0x8] sm:$0xf]
          %v724 = vld [vmem:[#allocation12 + $0xc] sm:$0xf]
          %v725 = vld [vmem:[%s6] sm:$0x1]
          %v727 = vperm.slane %v725, 0
          %v733 = vunpack.c.l.b16 %v721
          %v734 = vunpack.c.l.b16 %v722
          %v735 = vunpack.c.l.b16 %v723
          %v736 = vunpack.c.l.b16 %v724
          %v737 = vpack.c.b16 %v734, %v733
          %v738 = vpack.c.b16 %v736, %v735
          %vm741 = vcmask 261120
          %v743 = vsel %vm741, %v719, 0
          %745 = vmatpush.bf16.msra.mxu0 0
          %746 = vmatpush.bf16.msra.mxu0 0
          %747 = vmatpush.bf16.msra.mxu0 0
          %748 = vmatpush.bf16.msra.mxu0 0
          %749 = vmatpush.bf16.msra.mxu0 0
          %750 = vmatpush.bf16.msra.mxu0 0
          %751 = vmatpush.bf16.msra.mxu0 %v738
          %752 = vmatpush.bf16.msra.mxu0 %v737
          %753 = vmatmul.bf16.gmra.mxu0 %v743
          %v754 = vpop.f32.mrf.mxu0
          %v755 = vadd.f32 %v727, %v754
          %v756 = vpop.f32.mrf.mxu0
          %757 = vdwg.mxu0
          %v758 = vld [vmem:[#allocation13] sm:$0xf]
          %v759 = vld [vmem:[#allocation13 + $0x4] sm:$0xf]
          %v760 = vld [vmem:[#allocation13 + $0x8] sm:$0xf]
          %v761 = vld [vmem:[#allocation13 + $0xc] sm:$0xf]
          %v762 = vld [vmem:[%s8] sm:$0x1]
          %v764 = vperm.slane %v762, 0
          %v770 = vunpack.c.l.b16 %v758
          %v771 = vunpack.c.l.b16 %v759
          %v772 = vunpack.c.l.b16 %v760
          %v773 = vunpack.c.l.b16 %v761
          %v774 = vpack.c.b16 %v771, %v770
          %v775 = vpack.c.b16 %v773, %v772
          %v779 = vsel %vm741, %v720, 0
          %781 = vmatpush.bf16.msra.mxu0 0
          %782 = vmatpush.bf16.msra.mxu0 0
          %783 = vmatpush.bf16.msra.mxu0 0
          %784 = vmatpush.bf16.msra.mxu0 0
          %785 = vmatpush.bf16.msra.mxu0 0
          %786 = vmatpush.bf16.msra.mxu0 0
          %787 = vmatpush.bf16.msra.mxu0 %v775
          %788 = vmatpush.bf16.msra.mxu0 %v774
          %789 = vmatmul.bf16.gmra.mxu0 %v779
          %v790 = vpop.f32.mrf.mxu0
          %v791 = vadd.f32 %v764, %v790
          %v792 = vpop.f32.mrf.mxu0
          %793 = vdwg.mxu0
          %v794 = vpack.c.bf16 %v755, %v755
          %vm795 = vcmask 257024
          %796 = vst.msk [vmem:[#allocation2] sm:$0xf] %vm795, %v794
          %v797 = vpack.c.bf16 %v791, %v791
          %798 = vst.msk [vmem:[#allocation3] sm:$0xf] %vm795, %v797
        $region120: #{tpu_custom_call.1} parent=83 // pred_fallthru
          _
        %v799 = vld [vmem:[%s609] sm:$0xf]
        %v800 = vld [vmem:[#allocation10] sm:$0xf]
        %v801 = vld [vmem:[#allocation10 + $0x4] sm:$0xf]
        %v802 = vld [vmem:[#allocation10 + $0x8] sm:$0xf]
        %v803 = vld [vmem:[#allocation10 + $0xc] sm:$0xf]
        %v804 = vld [vmem:[%s4] sm:$0x1]
        %v806 = vperm.slane %v804, 0
        %v812 = vunpack.c.l.b16 %v800
        %v813 = vunpack.c.l.b16 %v801
        %v814 = vunpack.c.l.b16 %v802
        %v815 = vunpack.c.l.b16 %v803
        %v816 = vpack.c.b16 %v813, %v812
        %v817 = vpack.c.b16 %v815, %v814
        %vm820 = vcmask 261120
        %v822 = vsel %vm820, %v799, 0
        %824 = vmatpush.bf16.msra.mxu0 0
        %825 = vmatpush.bf16.msra.mxu0 0
        %826 = vmatpush.bf16.msra.mxu0 0
        %827 = vmatpush.bf16.msra.mxu0 0
        %828 = vmatpush.bf16.msra.mxu0 0
        %829 = vmatpush.bf16.msra.mxu0 0
        %830 = vmatpush.bf16.msra.mxu0 %v817
        %831 = vmatpush.bf16.msra.mxu0 %v816
        %832 = vmatmul.bf16.gmra.mxu0 %v822
        %v833 = vpop.f32.mrf.mxu0
        %v834 = vadd.f32 %v806, %v833
        %v835 = vpop.f32.mrf.mxu0
        %836 = vdwg.mxu0
        %v837 = vmul.f32 %v834, 0.17677669
        %v838 = vpack.c.bf16 %v837, %v837
        %v839 = vld [vmem:[#allocation2] sm:$0xf]
        %v840 = vld [vmem:[#allocation3] sm:$0xf]
        %vm841 = vcmask 64512
        %v843 = vsel %vm841, %v838, 0
        %v846 = vsel %vm841, %v839, 0
        %848 = vmatpush.bf16.xpose.msra.mxu0 0
        %849 = vmatpush.bf16.xpose.msra.mxu0 0
        %850 = vmatpush.bf16.xpose.msra.mxu0 0
        %851 = vmatpush.bf16.xpose.msra.mxu0 0
        %852 = vmatpush.bf16.xpose.msra.mxu0 0
        %853 = vmatpush.bf16.xpose.msra.mxu0 0
        %854 = vmatpush.bf16.xpose.msra.mxu0 0
        %855 = vmatpush.bf16.xpose.msra.mxu0 %v846
        %856 = vmatmul.bf16.gmra.mxu0 %v843
        %v857 = vpop.f32.mrf.mxu0
        %v858 = vadd.f32 0.0, %v857
        %v859 = vpop.f32.mrf.mxu0
        %860 = vdwg.mxu0
        %v861 = vsel %vm841, %v858, -inf
        %862 = vmax.xlane.f32.xlu0 %v861
        %v863 = vpop.xlane.xlu0 %862
        %v864 = vsub.f32 %v858, %v863
        %v865 = vmul.f32 %v864, 1.442695
        %v866 = vpow.pop %v865
        %v867 = vsel %vm841, %v866, 0.0
        %868 = vadd.xlane.f32.xlu0 %v867
        %v869 = vpop.xlane.xlu0 %868
        %v870 = vrcp.pop %v869
        %v871 = vmul.f32 %v866, %v870
        %v872 = vpack.c.bf16 %v871, %v871
        %v874 = vsel %vm841, %v872, 0
        %vm876 = vcmask 1043456
        %v878 = vsel %vm876, %v840, 0
        %880 = vmatpush.bf16.msra.mxu0 0
        %881 = vmatpush.bf16.msra.mxu0 0
        %882 = vmatpush.bf16.msra.mxu0 0
        %883 = vmatpush.bf16.msra.mxu0 0
        %884 = vmatpush.bf16.msra.mxu0 0
        %885 = vmatpush.bf16.msra.mxu0 0
        %886 = vmatpush.bf16.msra.mxu0 0
        %887 = vmatpush.bf16.msra.mxu0 %v878
        %888 = vmatmul.bf16.gmra.mxu0 %v874
        %v889 = vpop.f32.mrf.mxu0
        %v890 = vadd.f32 0.0, %v889
        %v891 = vpop.f32.mrf.mxu0
        %892 = vdwg.mxu0
        %v894 = vunpack.c.l.b16 %v838
        %v895 = vpack.c.b16 %v894, %v894
        %896 = vrot.lane.b32.xlu0 %v895, 120
        %v897 = vpop.permute.xlu0 %896
        %v899 = vunpack.c.l.b16 %v839
        %v900 = vpack.c.b16 %v899, %v899
        %901 = vrot.lane.b32.xlu0 %v900, 120
        %v902 = vpop.permute.xlu0 %901
        %v904 = vsel %vm841, %v897, 0
        %v907 = vsel %vm841, %v902, 0
        %909 = vmatpush.bf16.xpose.msra.mxu0 0
        %910 = vmatpush.bf16.xpose.msra.mxu0 0
        %911 = vmatpush.bf16.xpose.msra.mxu0 0
        %912 = vmatpush.bf16.xpose.msra.mxu0 0
        %913 = vmatpush.bf16.xpose.msra.mxu0 0
        %914 = vmatpush.bf16.xpose.msra.mxu0 0
        %915 = vmatpush.bf16.xpose.msra.mxu0 0
        %916 = vmatpush.bf16.xpose.msra.mxu0 %v907
        %917 = vmatmul.bf16.gmra.mxu0 %v904
        %v918 = vpop.f32.mrf.mxu0
        %v919 = vadd.f32 0.0, %v918
        %v920 = vpop.f32.mrf.mxu0
        %921 = vdwg.mxu0
        %v922 = vsel %vm841, %v919, -inf
        %923 = vmax.xlane.f32.xlu0 %v922
        %v924 = vpop.xlane.xlu0 %923
        %v925 = vsub.f32 %v919, %v924
        %v926 = vmul.f32 %v925, 1.442695
        %v927 = vpow.pop %v926
        %v928 = vsel %vm841, %v927, 0.0
        %929 = vadd.xlane.f32.xlu0 %v928
        %v930 = vpop.xlane.xlu0 %929
        %v931 = vrcp.pop %v930
        %v932 = vmul.f32 %v927, %v931
        %v933 = vpack.c.bf16 %v932, %v932
        %v935 = vunpack.c.l.b16 %v840
        %v936 = vpack.c.b16 %v935, %v935
        %937 = vrot.lane.b32.xlu0 %v936, 120
        %v938 = vpop.permute.xlu0 %937
        %v940 = vsel %vm841, %v933, 0
        %v943 = vsel %vm876, %v938, 0
        %945 = vmatpush.bf16.msra.mxu0 0
        %946 = vmatpush.bf16.msra.mxu0 0
        %947 = vmatpush.bf16.msra.mxu0 0
        %948 = vmatpush.bf16.msra.mxu0 0
        %949 = vmatpush.bf16.msra.mxu0 0
        %950 = vmatpush.bf16.msra.mxu0 0
        %951 = vmatpush.bf16.msra.mxu0 0
        %952 = vmatpush.bf16.msra.mxu0 %v943
        %953 = vmatmul.bf16.gmra.mxu0 %v940
        %v954 = vpop.f32.mrf.mxu0
        %v955 = vadd.f32 0.0, %v954
        %v956 = vpop.f32.mrf.mxu0
        %957 = vdwg.mxu0
        %958 = vrot.lane.b32.xlu0 %v895, 112
        %v959 = vpop.permute.xlu0 %958
        %960 = vrot.lane.b32.xlu0 %v900, 112
        %v961 = vpop.permute.xlu0 %960
        %v963 = vsel %vm841, %v959, 0
        %v966 = vsel %vm841, %v961, 0
        %968 = vmatpush.bf16.xpose.msra.mxu0 0
        %969 = vmatpush.bf16.xpose.msra.mxu0 0
        %970 = vmatpush.bf16.xpose.msra.mxu0 0
        %971 = vmatpush.bf16.xpose.msra.mxu0 0
        %972 = vmatpush.bf16.xpose.msra.mxu0 0
        %973 = vmatpush.bf16.xpose.msra.mxu0 0
        %974 = vmatpush.bf16.xpose.msra.mxu0 0
        %975 = vmatpush.bf16.xpose.msra.mxu0 %v966
        %976 = vmatmul.bf16.gmra.mxu0 %v963
        %v977 = vpop.f32.mrf.mxu0
        %v978 = vadd.f32 0.0, %v977
        %v979 = vpop.f32.mrf.mxu0
        %980 = vdwg.mxu0
        %v981 = vsel %vm841, %v978, -inf
        %982 = vmax.xlane.f32.xlu0 %v981
        %v983 = vpop.xlane.xlu0 %982
        %v984 = vsub.f32 %v978, %v983
        %v985 = vmul.f32 %v984, 1.442695
        %v986 = vpow.pop %v985
        %v987 = vsel %vm841, %v986, 0.0
        %988 = vadd.xlane.f32.xlu0 %v987
        %v989 = vpop.xlane.xlu0 %988
        %v990 = vrcp.pop %v989
        %v991 = vmul.f32 %v986, %v990
        %v992 = vpack.c.bf16 %v991, %v991
        %993 = vrot.lane.b32.xlu0 %v936, 112
        %v994 = vpop.permute.xlu0 %993
        %v996 = vsel %vm841, %v992, 0
        %v999 = vsel %vm876, %v994, 0
        %1001 = vmatpush.bf16.msra.mxu0 0
        %1002 = vmatpush.bf16.msra.mxu0 0
        %1003 = vmatpush.bf16.msra.mxu0 0
        %1004 = vmatpush.bf16.msra.mxu0 0
        %1005 = vmatpush.bf16.msra.mxu0 0
        %1006 = vmatpush.bf16.msra.mxu0 0
        %1007 = vmatpush.bf16.msra.mxu0 0
        %1008 = vmatpush.bf16.msra.mxu0 %v999
        %1009 = vmatmul.bf16.gmra.mxu0 %v996
        %v1010 = vpop.f32.mrf.mxu0
        %v1011 = vadd.f32 0.0, %v1010
        %v1012 = vpop.f32.mrf.mxu0
        %1013 = vdwg.mxu0
        %1014 = vrot.lane.b32.xlu0 %v895, 104
        %v1015 = vpop.permute.xlu0 %1014
        %1016 = vrot.lane.b32.xlu0 %v900, 104
        %v1017 = vpop.permute.xlu0 %1016
        %v1019 = vsel %vm841, %v1015, 0
        %v1022 = vsel %vm841, %v1017, 0
        %1024 = vmatpush.bf16.xpose.msra.mxu0 0
        %1025 = vmatpush.bf16.xpose.msra.mxu0 0
        %1026 = vmatpush.bf16.xpose.msra.mxu0 0
        %1027 = vmatpush.bf16.xpose.msra.mxu0 0
        %1028 = vmatpush.bf16.xpose.msra.mxu0 0
        %1029 = vmatpush.bf16.xpose.msra.mxu0 0
        %1030 = vmatpush.bf16.xpose.msra.mxu0 0
        %1031 = vmatpush.bf16.xpose.msra.mxu0 %v1022
        %1032 = vmatmul.bf16.gmra.mxu0 %v1019
        %v1033 = vpop.f32.mrf.mxu0
        %v1034 = vadd.f32 0.0, %v1033
        %v1035 = vpop.f32.mrf.mxu0
        %1036 = vdwg.mxu0
        %v1037 = vsel %vm841, %v1034, -inf
        %1038 = vmax.xlane.f32.xlu0 %v1037
        %v1039 = vpop.xlane.xlu0 %1038
        %v1040 = vsub.f32 %v1034, %v1039
        %v1041 = vmul.f32 %v1040, 1.442695
        %v1042 = vpow.pop %v1041
        %v1043 = vsel %vm841, %v1042, 0.0
        %1044 = vadd.xlane.f32.xlu0 %v1043
        %v1045 = vpop.xlane.xlu0 %1044
        %v1046 = vrcp.pop %v1045
        %v1047 = vmul.f32 %v1042, %v1046
        %v1048 = vpack.c.bf16 %v1047, %v1047
        %1049 = vrot.lane.b32.xlu0 %v936, 104
        %v1050 = vpop.permute.xlu0 %1049
        %v1052 = vsel %vm841, %v1048, 0
        %v1055 = vsel %vm876, %v1050, 0
        %1057 = vmatpush.bf16.msra.mxu0 0
        %1058 = vmatpush.bf16.msra.mxu0 0
        %1059 = vmatpush.bf16.msra.mxu0 0
        %1060 = vmatpush.bf16.msra.mxu0 0
        %1061 = vmatpush.bf16.msra.mxu0 0
        %1062 = vmatpush.bf16.msra.mxu0 0
        %1063 = vmatpush.bf16.msra.mxu0 0
        %1064 = vmatpush.bf16.msra.mxu0 %v1055
        %1065 = vmatmul.bf16.gmra.mxu0 %v1052
        %v1066 = vpop.f32.mrf.mxu0
        %v1067 = vadd.f32 0.0, %v1066
        %v1068 = vpop.f32.mrf.mxu0
        %1069 = vdwg.mxu0
        %1071 = vrot.lane.b32.xlu0 %v955, 8
        %v1072 = vpop.permute.xlu0 %1071
        %1075 = vrot.lane.b32.xlu0 %v1011, 16
        %v1076 = vpop.permute.xlu0 %1075
        %1079 = vrot.lane.b32.xlu0 %v1067, 24
        %v1080 = vpop.permute.xlu0 %1079
        %v1082 = vsel %vm841, %v890, %v1072
        %vm1083 = vcmask 130048
        %v1084 = vsel %vm1083, %v1082, %v1076
        %vm1085 = vcmask 195584
        %v1086 = vsel %vm1085, %v1084, %v1080
        %v1087 = vld [vmem:[%s9] sm:$0x1]
        %v1089 = vperm.slane %v1087, 0
        %v1091 = vmul.f32 %v834, %v1089
        %v1092 = vadd.f32 %v1086, %v1091
        %v1093 = vpack.c.bf16 %v1092, %v1092
        %v1094 = vld [vmem:[#allocation15] sm:$0xf]
        %v1095 = vld [vmem:[#allocation15 + $0x4] sm:$0xf]
        %v1096 = vld [vmem:[#allocation15 + $0x8] sm:$0xf]
        %v1097 = vld [vmem:[#allocation15 + $0xc] sm:$0xf]
        %v1098 = vld [vmem:[%s11] sm:$0x1]
        %v1100 = vperm.slane %v1098, 0
        %v1106 = vunpack.c.l.b16 %v1094
        %v1107 = vunpack.c.l.b16 %v1095
        %v1108 = vunpack.c.l.b16 %v1096
        %v1109 = vunpack.c.l.b16 %v1097
        %v1110 = vpack.c.b16 %v1107, %v1106
        %v1111 = vpack.c.b16 %v1109, %v1108
        %v1115 = vsel %vm820, %v1093, 0
        %1117 = vmatpush.bf16.msra.mxu0 0
        %1118 = vmatpush.bf16.msra.mxu0 0
        %1119 = vmatpush.bf16.msra.mxu0 0
        %1120 = vmatpush.bf16.msra.mxu0 0
        %1121 = vmatpush.bf16.msra.mxu0 0
        %1122 = vmatpush.bf16.msra.mxu0 0
        %1123 = vmatpush.bf16.msra.mxu0 %v1111
        %1124 = vmatpush.bf16.msra.mxu0 %v1110
        %1125 = vmatmul.bf16.gmra.mxu0 %v1115
        %v1126 = vpop.f32.mrf.mxu0
        %v1127 = vadd.f32 %v1100, %v1126
        %v1128 = vpop.f32.mrf.mxu0
        %1129 = vdwg.mxu0
        %v1130 = vsel %vm820, %v1127, 0.0
        %1131 = vadd.xlane.f32.xlu0 %v1130
        %v1132 = vpop.xlane.xlu0 %1131
        %v1133 = vrcp.pop 32.0
        %v1134 = vmul.f32 32.0, %v1133
        %v1135 = vsub.f32 1.0, %v1134
        %v1136 = vmul.f32 %v1133, %v1135
        %v1137 = vadd.f32 %v1133, %v1136
        %vm1138 = vweird.f32 %v1133
        %v1139 = vsel %vm1138, %v1133, %v1137
        %v1140 = vmul.f32 %v1132, %v1139
        %v1141 = vsub.f32 %v1127, %v1140
        %v1142 = vmul.f32 %v1141, %v1141
        %v1143 = vsel %vm820, %v1142, 0.0
        %1144 = vadd.xlane.f32.xlu0 %v1143
        %v1145 = vpop.xlane.xlu0 %1144
        %v1146 = vmul.f32 %v1145, %v1139
        %v1147 = vadd.f32 %v1146, 1e-05
        %v1148 = vrsqrt.pop %v1147
        %v1149 = vmul.f32 %v1148, %v1147
        %v1150 = vmul.f32 %v1149, %v1148
        %v1151 = vmul.f32 0.5, %v1150
        %v1152 = vsub.f32 1.5, %v1151
        %v1153 = vmul.f32 %v1148, %v1152
        %vm1154 = vweird.f32 %v1147
        %vm1155 = vweird.f32 %v1148
        %vm1156 = vmor %vm1154, %vm1155
        %v1157 = vsel %vm1156, %v1148, %v1153
        %v1158 = vmul.f32 %v1141, %v1157
        %v1159 = vld [vmem:[%s12] sm:$0x1]
        %v1161 = vperm.slane %v1159, 0
        %v1163 = vmul.f32 %v1158, %v1161
        %v1164 = vld [vmem:[%s13] sm:$0x1]
        %v1166 = vperm.slane %v1164, 0
        %v1168 = vadd.f32 %v1163, %v1166
        %v1169 = vpack.c.bf16 %v1168, %v1168
        %v1170 = vld [vmem:[#allocation16] sm:$0xf]
        %v1171 = vld [vmem:[#allocation16 + $0x4] sm:$0xf]
        %v1172 = vld [vmem:[#allocation16 + $0x8] sm:$0xf]
        %v1173 = vld [vmem:[#allocation16 + $0xc] sm:$0xf]
        %v1174 = vld [vmem:[%s15] sm:$0x1]
        %v1176 = vperm.slane %v1174, 0
        %v1182 = vunpack.c.l.b16 %v1170
        %v1183 = vunpack.c.l.b16 %v1171
        %v1184 = vunpack.c.l.b16 %v1172
        %v1185 = vunpack.c.l.b16 %v1173
        %v1186 = vpack.c.b16 %v1183, %v1182
        %v1187 = vpack.c.b16 %v1185, %v1184
        %v1191 = vsel %vm820, %v1169, 0
        %1193 = vmatpush.bf16.msra.mxu0 0
        %1194 = vmatpush.bf16.msra.mxu0 0
        %1195 = vmatpush.bf16.msra.mxu0 0
        %1196 = vmatpush.bf16.msra.mxu0 0
        %1197 = vmatpush.bf16.msra.mxu0 0
        %1198 = vmatpush.bf16.msra.mxu0 0
        %1199 = vmatpush.bf16.msra.mxu0 %v1187
        %1200 = vmatpush.bf16.msra.mxu0 %v1186
        %1201 = vmatmul.bf16.gmra.mxu0 %v1191
        %v1202 = vpop.f32.mrf.mxu0
        %v1203 = vadd.f32 %v1176, %v1202
        %v1204 = vpop.f32.mrf.mxu0
        %1205 = vdwg.mxu0
        %v1206 = vmul.f32 %v1203, 0.5
        %v1207 = vmul.f32 %v1203, 0.70710677
        %v1208 = vand.u32 2147483647, %v1207
        %v1209 = vmul.f32 %v1208, 0.3275911
        %v1210 = vadd.f32 %v1209, 1.0
        %v1211 = vrcp.pop %v1210
        %v1212 = vmul.f32 %v1211, 1.0614054
        %v1213 = vadd.f32 %v1212, -1.4531521
        %v1214 = vmul.f32 %v1213, %v1211
        %v1215 = vadd.f32 %v1214, 1.4214138
        %v1216 = vmul.f32 %v1215, %v1211
        %v1217 = vadd.f32 %v1216, -0.28449672
        %v1218 = vmul.f32 %v1217, %v1211
        %v1219 = vadd.f32 %v1218, 0.2548296
        %v1220 = vmul.f32 %v1219, %v1211
        %v1221 = vsub.f32 0.0, %v1208
        %v1222 = vmul.f32 %v1221, %v1208
        %v1223 = vmul.f32 %v1222, 1.442695
        %v1224 = vpow.pop %v1223
        %v1225 = vmul.f32 %v1220, %v1224
        %v1226 = vsub.f32 1.0, %v1225
        %vm1227 = vcmp.ge.f32.partialorder %v1207, 0.0
        %v1228 = vsub.f32 0.0, %v1226
        %v1229 = vsel %vm1227, %v1226, %v1228
        %v1230 = vadd.f32 %v1229, 1.0
        %v1231 = vmul.f32 %v1206, %v1230
        %1232 = vst.msk [vmem:[%s713] sm:$0xff] %vm820, %v1231
        %s1233 = sand.u32 %s414, 1
        %s1234 = scalar_lea.sflag [#allocation6], %s1233
        %s1235 = sand.u32 %s414, 1
        %s1236 = smul.addr %s1235, 8
        %s1237 = scalar_lea.vmem [#allocation18], %s1236
        // Predicated region
        $region121: #{tpu_custom_call.1} parent=83 // pred_check
          %p1238 = pneg %p424
        $region122: #{tpu_custom_call.1} parent=83 // pred_check_branch
          %1240 = sbr.rel (%p1238) target = $region124
        $region123: #{tpu_custom_call.1} parent=83 // pred_region
          %1242 = vsyncadd %s1234, 0
          %s1243 = sadd.s32 %s44, %s43
          %s1244 = smul.addr %s1243, 8
          %s1245 = scalar_lea.hbm %s16, %s1244
          %s1247 = sshll.u32 %s1237, 4
          %s1248 = int_to_ptr.vmem [resolvable:$true] %s1247
          %s1249 = sshll.u32 %s1245, 4
          %s1250 = int_to_ptr.hbm [resolvable:$true] %s1249
          %1252 = dma.vmem_to_hbm [thread:$0]  %s1248, 128, %s1250, %s1234
        $region124: #{tpu_custom_call.1} parent=83 // pred_fallthru
          _
      $region84: #{tpu_custom_call.1} parent=5 // pred_fallthru
        _
      %p1253 = scmp.le.s32.totalorder 2, %s34
      // Predicated region
      $region125: #{tpu_custom_call.1} parent=5 // pred_check
        %p1254 = pneg %p1253
      $region126: #{tpu_custom_call.1} parent=5 // pred_check_branch
        %1256 = sbr.rel (%p1254) target = $region128
      $region127: #{tpu_custom_call.1} parent=5 // pred_region
        %s1257 = ssub.s32 %s34, 2
        // Predicated region
        $region129: #{tpu_custom_call.1} parent=127 // pred_check
          %p1258 = pneg %p430
        $region130: #{tpu_custom_call.1} parent=127 // pred_check_branch
          %1260 = sbr.rel (%p1258) target = $region132
        $region131: #{tpu_custom_call.1} parent=127 // pred_region
          %s1261 = sand.u32 %s415, 1
          %s1262 = scalar_lea.sflag [#allocation6], %s1261
          %s1263 = sand.u32 %s415, 1
          %s1264 = smul.addr %s1263, 8
          %s1265 = scalar_lea.vmem [#allocation18], %s1264
          %1267 = dma.done %s1262, 128
        $region132: #{tpu_custom_call.1} parent=127 // pred_fallthru
          _
      $region128: #{tpu_custom_call.1} parent=5 // pred_fallthru
        _
    $region6: #{tpu_custom_call.1} parent=1 // loop_footer
      %s38 = sadd.s32 1, %s34
    $region7: #{tpu_custom_call.1} parent=1 // loop_footer_branch
      %33 = sbr.rel target = $region3
    $region8: #{tpu_custom_call.1} parent=1 // loop_exit
      _
    %1268 = vsyncpa [#allocation5], 1
    %s1269 = scalar_lea.sflag [#allocation5], 1
    %1270 = vsyncpa %s1269, 1
    %1271 = vsyncpa [#allocation8], 1
    %s1272 = scalar_lea.sflag [#allocation8], 1
    %1273 = vsyncpa %s1272, 1
    %1274 = vsyncpa [#allocation11], 1
    %1275 = vsyncpa [#allocation14], 1
    %1276 = vsyncpa [#allocation17], 1
    %1277 = vsyncpa [#allocation6], 1
    %s1278 = scalar_lea.sflag [#allocation6], 1
    %1279 = vsyncpa %s1278, 1

</llo_original>
